<compile_context>
chip_gen: v7x
topology: tpu7x:2x2x1
jax: 0.10.0
libtpu: 0.0.40
codegen_flags: <defaults>
</compile_context>

<pallas_src>
import jax
import jax.numpy as jnp
import numpy as np
from jax import lax
from jax.experimental import pallas as pl
from jax.experimental.pallas import tpu as pltpu

SAMPLE_RATE = 200
N_FFT = SAMPLE_RATE                 # freq_resolution(=1) * sample_rate
WIN_LENGTH = 16
HOP_LENGTH = 8
N_FREQ_OUT = 100                    # [..., :100, :] slice over frequency bins
N_FRAME_OUT = 100                   # [..., :, :100] slice over frames (time)
FREQ_PAD = 104                      # smallest multiple of 8 >= 100 (sublane aligned)
T_PAD = 128                         # per-(b,c) time padded to a full lane tile
WIN_OFFSET = (N_FFT - WIN_LENGTH) // 2      # 92: window centered inside the n_fft frame
LEFT_PAD = N_FFT // 2 - WIN_OFFSET          # 8: only these reflected samples are needed

# Slice-based framing below relies on the 16-tap window spanning exactly 2 hops.
assert WIN_LENGTH == 2 * HOP_LENGTH


def _tensorcores_per_device() -> int:
    """2 on megacore / dual-TC chips (v4, v5p, v7x); 1 on v5e/v6e and unknown."""
    try:
        kind = jax.devices()[0].device_kind.lower()
    except Exception:
        return 1
    if any(tag in kind for tag in ("v7", "7x", "v4", "v5p")):
        return 2
    return 1


def _pick_grid(n_bc, num_tc, max_bc_tile=32):
    """Block count is a multiple of num_tc (even sharding across TensorCores);
    bc_tile as large as VMEM comfort allows (amortize ~0.35us/step, bigger MXU N)."""
    n_blocks = num_tc
    while -(-n_bc // n_blocks) > max_bc_tile:
        n_blocks += num_tc
    bc_tile = -(-n_bc // n_blocks)
    return n_blocks, bc_tile, n_blocks * bc_tile


def _dft_basis():
    """Windowed real/imag DFT basis: (2*FREQ_PAD, WIN_LENGTH) f32.

    Rows [0, FREQ_PAD) = cos (real) part, rows [FREQ_PAD, 2*FREQ_PAD) = -sin
    (imag) part; frequency rows >= N_FREQ_OUT are zero padding.  Built in
    float64 (phases reach ~333 rad) and cast once to float32."""
    m = np.arange(WIN_LENGTH, dtype=np.float64)
    f = np.arange(N_FREQ_OUT, dtype=np.float64)
    w = 0.5 - 0.5 * np.cos(2.0 * np.pi * m / WIN_LENGTH)        # periodic hann
    phase = 2.0 * np.pi * np.outer(f, m + WIN_OFFSET) / N_FFT   # (100, 16)
    cos_t = w[None, :] * np.cos(phase)
    sin_t = -w[None, :] * np.sin(phase)
    pad = ((0, FREQ_PAD - N_FREQ_OUT), (0, 0))
    basis = np.concatenate([np.pad(cos_t, pad), np.pad(sin_t, pad)], axis=0)
    return jnp.asarray(basis, dtype=jnp.float32)                # (208, 16)


def _spectrogram_kernel(frames_ref, basis_ref, out_ref):
    """frames_ref: (16, bc_tile*T_PAD)   transposed frames, column = bc*T_PAD + t
       basis_ref : (2*FREQ_PAD, 16)      [cos ; -sin] windowed DFT basis
       out_ref   : (bc_tile, FREQ_PAD, T_PAD)  log power spectrogram, (freq, time)
    """
    # Natural (M,K)x(K,N) MXU matmul; result rows are [cos-freqs ; sin-freqs],
    # columns are lane-dense (b,c,t) frames -> already in torch (freq, time) order.
    s = lax.dot_general(
        basis_ref[...], frames_ref[...],
        dimension_numbers=(((1,), (0,)), ((), ())),
        preferred_element_type=jnp.float32)             # (2*FREQ_PAD, bc_tile*T_PAD)
    for b in range(out_ref.shape[0]):                   # static unroll (<= 32)
        re = s[:FREQ_PAD, b * T_PAD:(b + 1) * T_PAD]    # (104, 128) tile-aligned slice
        im = s[FREQ_PAD:, b * T_PAD:(b + 1) * T_PAD]
        out_ref[b, :, :] = jnp.log(re * re + im * im + 1e-10)   # lane-dense 104x128 store


def _extract_frames_t(x, T, n_bc_pad):
    """x: (B, C, L) -> transposed frames (WIN_LENGTH, n_bc_pad*T_PAD) f32.

    Column bc*T_PAD + t holds the 16 samples of frame t of channel bc, i.e.
    original samples [8t-8, 8t+8) with torch.stft(center=True, reflect) padding.
    Uses slices/reshapes plus one small hop-dim transpose; frames with t >= T
    (and bc >= B*C) are zero filler that the epilogue slice discards.
    Note: reflect padding requires L >= 9 (same limitation as torch's reflect)."""
    B, C, L = x.shape
    n_bc = B * C
    pad_right = max(0, HOP_LENGTH * T - L)
    xs = jnp.pad(x.astype(jnp.float32).reshape(n_bc, L),
                 ((0, 0), (LEFT_PAD, pad_right)), mode="reflect")
    xs = xs[:, :HOP_LENGTH * (T + 1)]
    xs = jnp.pad(xs, ((0, n_bc_pad - n_bc),
                      (0, HOP_LENGTH * (T_PAD + 1 - (T + 1)))))
    a = xs.reshape(n_bc_pad, T_PAD + 1, HOP_LENGTH)     # (n_bc_pad, 129, 8)
    at = a.transpose(2, 0, 1)                           # (8, n_bc_pad, 129)
    lo = at[:, :, :T_PAD].reshape(HOP_LENGTH, n_bc_pad * T_PAD)   # samples 8t .. 8t+7
    hi = at[:, :, 1:].reshape(HOP_LENGTH, n_bc_pad * T_PAD)       # samples 8t+8 .. 8t+15
    return jnp.concatenate([lo, hi], axis=0)            # (16, n_bc_pad*128)


@jax.jit
def spectrogram_feature_binary2(x):
    """(B, C, L) -> (B, C, 100, min(100, 1 + L//8)) log power spectrogram."""
    B, C, L = x.shape
    n_bc = B * C
    T = min(1 + L // HOP_LENGTH, N_FRAME_OUT)

    num_tc = _tensorcores_per_device()
    n_blocks, bc_tile, n_bc_pad = _pick_grid(n_bc, num_tc)
    rows_per_block = bc_tile * T_PAD

    frames_t = _extract_frames_t(x, T, n_bc_pad)        # (16, n_bc_pad*128) lane-dense
    basis = _dft_basis()                                 # (208, 16), fetched once

    out = pl.pallas_call(
        _spectrogram_kernel,
        out_shape=jax.ShapeDtypeStruct((n_bc_pad, FREQ_PAD, T_PAD), jnp.float32),
        grid=(n_blocks,),
        in_specs=[
            pl.BlockSpec((WIN_LENGTH, rows_per_block), lambda i: (0, i)),
            pl.BlockSpec((2 * FREQ_PAD, WIN_LENGTH), lambda i: (0, 0)),
        ],
        out_specs=pl.BlockSpec((bc_tile, FREQ_PAD, T_PAD), lambda i: (i, 0, 0)),
        compiler_params=pltpu.CompilerParams(dimension_semantics=("parallel",)),
    )(frames_t, basis)

    out = out[:n_bc].reshape(B, C, FREQ_PAD, T_PAD)
    return out[:, :, :N_FREQ_OUT, :T]                   # single slice epilogue, no transpose


def _reference(x):
    """Independent pure-jnp reference: full center padding, gather framing, einsum DFT."""
    B, C, L = x.shape
    pad = N_FFT // 2
    xp = jnp.pad(x.astype(jnp.float32), ((0, 0), (0, 0), (pad, pad)), mode="reflect")
    T = min(1 + L // HOP_LENGTH, N_FRAME_OUT)
    starts = WIN_OFFSET + HOP_LENGTH * np.arange(T)
    idx = starts[:, None] + np.arange(WIN_LENGTH)[None, :]       # (T, 16)
    frames = xp[:, :, idx]                                       # (B, C, T, 16)
    m = np.arange(WIN_LENGTH, dtype=np.float64)
    f = np.arange(N_FREQ_OUT, dtype=np.float64)
    w = 0.5 - 0.5 * np.cos(2.0 * np.pi * m / WIN_LENGTH)
    phase = 2.0 * np.pi * np.outer(f, m + WIN_OFFSET) / N_FFT
    cos_t = jnp.asarray(w[None, :] * np.cos(phase), dtype=jnp.float32)
    sin_t = jnp.asarray(-w[None, :] * np.sin(phase), dtype=jnp.float32)
    re = jnp.einsum("bctm,fm->bcft", frames, cos_t)
    im = jnp.einsum("bctm,fm->bcft", frames, sin_t)
    return jnp.log(re * re + im * im + 1e-10)                    # (B, C, 100, T)


if __name__ == "__main__":
    key = jax.random.PRNGKey(0)
    B, C, L = 2, 4, 800                       # (batch, eeg channels, time samples)
    x = jax.random.normal(key, (B, C, L), dtype=jnp.float32)

    out = jax.block_until_ready(spectrogram_feature_binary2(x))
    assert out.shape == (B, C, 100, 100), out.shape

    ref = jax.block_until_ready(_reference(x))
    # atol headroom: log() amplifies f32 summation-order noise on near-cancelled bins;
    # any real framing/window/DFT bug shows up as O(1e-2..10) errors.
    np.testing.assert_allclose(np.asarray(out), np.asarray(ref), rtol=1e-4, atol=1e-3)
    print("KERNEL_OK")
</pallas_src>

<mosaic_0001>
module attributes {stable_mosaic.version = 11 : i64} {
  func.func @_spectrogram_kernel(%arg0: i32, %arg1: memref<16x1024xf32, #tpu.memory_space<vmem>>, %arg2: memref<208x16xf32, #tpu.memory_space<vmem>>, %arg3: memref<8x104x128xf32, #tpu.memory_space<vmem>>) attributes {dimension_semantics = [#tpu.dimension_semantics<parallel>], iteration_bounds = array<i64: 1>, scalar_prefetch = 0 : i64, scratch_operands = 0 : i64, tpu.core_type = #tpu.core_type<tc>, window_params = [{transform_indices = @transform_0, window_bounds = array<i64: 16, 1024>}, {pipeline_mode = #tpu.pipeline_mode<synchronous>, transform_indices = @transform_1, window_bounds = array<i64: 208, 16>}, {transform_indices = @transform_2, window_bounds = array<i64: 8, 104, 128>}]} {
    %c0 = arith.constant 0 : index
    %c0_0 = arith.constant 0 : index
    %0 = vector.load %arg2[%c0, %c0_0] : memref<208x16xf32, #tpu.memory_space<vmem>>, vector<208x16xf32>
    %c0_1 = arith.constant 0 : index
    %c0_2 = arith.constant 0 : index
    %1 = vector.load %arg1[%c0_1, %c0_2] : memref<16x1024xf32, #tpu.memory_space<vmem>>, vector<16x1024xf32>
    %cst = arith.constant dense<0.000000e+00> : vector<208x1024xf32>
    %2 = tpu.matmul %0, %1, %cst {dimension_numbers = #tpu.dot_dimension_numbers<[1], [0], [0], [1], [0, 0, 1, 1], [], []>} : vector<208x16xf32>, vector<16x1024xf32>, vector<208x1024xf32> -> vector<208x1024xf32>
    %3 = vector.extract_strided_slice %2 {offsets = [0, 0], sizes = [104, 128], strides = [1, 1]} : vector<208x1024xf32> to vector<104x128xf32>
    %4 = vector.extract_strided_slice %2 {offsets = [104, 0], sizes = [104, 128], strides = [1, 1]} : vector<208x1024xf32> to vector<104x128xf32>
    %5 = arith.mulf %3, %3 : vector<104x128xf32>
    %6 = arith.mulf %4, %4 : vector<104x128xf32>
    %7 = arith.addf %5, %6 : vector<104x128xf32>
    %cst_3 = arith.constant 1.000000e-10 : f32
    %8 = vector.broadcast %cst_3 : f32 to vector<104x128xf32>
    %9 = arith.addf %7, %8 : vector<104x128xf32>
    %10 = math.log %9 : vector<104x128xf32>
    %c0_4 = arith.constant 0 : index
    %c0_5 = arith.constant 0 : index
    %c0_6 = arith.constant 0 : index
    %11 = vector.load %arg3[%c0_4, %c0_5, %c0_6] : memref<8x104x128xf32, #tpu.memory_space<vmem>>, vector<1x104x128xf32>
    %12 = vector.shape_cast %11 : vector<1x104x128xf32> to vector<104x128xf32>
    %13 = vector.shape_cast %10 : vector<104x128xf32> to vector<1x104x128xf32>
    tpu.vector_store %arg3[%c0_4, %c0_5, %c0_6], %13 {strides = array<i32>} : memref<8x104x128xf32, #tpu.memory_space<vmem>>, vector<1x104x128xf32>,
    %14 = vector.extract_strided_slice %2 {offsets = [0, 128], sizes = [104, 128], strides = [1, 1]} : vector<208x1024xf32> to vector<104x128xf32>
    %15 = vector.extract_strided_slice %2 {offsets = [104, 128], sizes = [104, 128], strides = [1, 1]} : vector<208x1024xf32> to vector<104x128xf32>
    %16 = arith.mulf %14, %14 : vector<104x128xf32>
    %17 = arith.mulf %15, %15 : vector<104x128xf32>
    %18 = arith.addf %16, %17 : vector<104x128xf32>
    %cst_7 = arith.constant 1.000000e-10 : f32
    %19 = vector.broadcast %cst_7 : f32 to vector<104x128xf32>
    %20 = arith.addf %18, %19 : vector<104x128xf32>
    %21 = math.log %20 : vector<104x128xf32>
    %c1 = arith.constant 1 : index
    %c0_8 = arith.constant 0 : index
    %c0_9 = arith.constant 0 : index
    %22 = vector.load %arg3[%c1, %c0_8, %c0_9] : memref<8x104x128xf32, #tpu.memory_space<vmem>>, vector<1x104x128xf32>
    %23 = vector.shape_cast %22 : vector<1x104x128xf32> to vector<104x128xf32>
    %24 = vector.shape_cast %21 : vector<104x128xf32> to vector<1x104x128xf32>
    tpu.vector_store %arg3[%c1, %c0_8, %c0_9], %24 {strides = array<i32>} : memref<8x104x128xf32, #tpu.memory_space<vmem>>, vector<1x104x128xf32>,
    %25 = vector.extract_strided_slice %2 {offsets = [0, 256], sizes = [104, 128], strides = [1, 1]} : vector<208x1024xf32> to vector<104x128xf32>
    %26 = vector.extract_strided_slice %2 {offsets = [104, 256], sizes = [104, 128], strides = [1, 1]} : vector<208x1024xf32> to vector<104x128xf32>
    %27 = arith.mulf %25, %25 : vector<104x128xf32>
    %28 = arith.mulf %26, %26 : vector<104x128xf32>
    %29 = arith.addf %27, %28 : vector<104x128xf32>
    %cst_10 = arith.constant 1.000000e-10 : f32
    %30 = vector.broadcast %cst_10 : f32 to vector<104x128xf32>
    %31 = arith.addf %29, %30 : vector<104x128xf32>
    %32 = math.log %31 : vector<104x128xf32>
    %c2 = arith.constant 2 : index
    %c0_11 = arith.constant 0 : index
    %c0_12 = arith.constant 0 : index
    %33 = vector.load %arg3[%c2, %c0_11, %c0_12] : memref<8x104x128xf32, #tpu.memory_space<vmem>>, vector<1x104x128xf32>
    %34 = vector.shape_cast %33 : vector<1x104x128xf32> to vector<104x128xf32>
    %35 = vector.shape_cast %32 : vector<104x128xf32> to vector<1x104x128xf32>
    tpu.vector_store %arg3[%c2, %c0_11, %c0_12], %35 {strides = array<i32>} : memref<8x104x128xf32, #tpu.memory_space<vmem>>, vector<1x104x128xf32>,
    %36 = vector.extract_strided_slice %2 {offsets = [0, 384], sizes = [104, 128], strides = [1, 1]} : vector<208x1024xf32> to vector<104x128xf32>
    %37 = vector.extract_strided_slice %2 {offsets = [104, 384], sizes = [104, 128], strides = [1, 1]} : vector<208x1024xf32> to vector<104x128xf32>
    %38 = arith.mulf %36, %36 : vector<104x128xf32>
    %39 = arith.mulf %37, %37 : vector<104x128xf32>
    %40 = arith.addf %38, %39 : vector<104x128xf32>
    %cst_13 = arith.constant 1.000000e-10 : f32
    %41 = vector.broadcast %cst_13 : f32 to vector<104x128xf32>
    %42 = arith.addf %40, %41 : vector<104x128xf32>
    %43 = math.log %42 : vector<104x128xf32>
    %c3 = arith.constant 3 : index
    %c0_14 = arith.constant 0 : index
    %c0_15 = arith.constant 0 : index
    %44 = vector.load %arg3[%c3, %c0_14, %c0_15] : memref<8x104x128xf32, #tpu.memory_space<vmem>>, vector<1x104x128xf32>
    %45 = vector.shape_cast %44 : vector<1x104x128xf32> to vector<104x128xf32>
    %46 = vector.shape_cast %43 : vector<104x128xf32> to vector<1x104x128xf32>
    tpu.vector_store %arg3[%c3, %c0_14, %c0_15], %46 {strides = array<i32>} : memref<8x104x128xf32, #tpu.memory_space<vmem>>, vector<1x104x128xf32>,
    %47 = vector.extract_strided_slice %2 {offsets = [0, 512], sizes = [104, 128], strides = [1, 1]} : vector<208x1024xf32> to vector<104x128xf32>
    %48 = vector.extract_strided_slice %2 {offsets = [104, 512], sizes = [104, 128], strides = [1, 1]} : vector<208x1024xf32> to vector<104x128xf32>
    %49 = arith.mulf %47, %47 : vector<104x128xf32>
    %50 = arith.mulf %48, %48 : vector<104x128xf32>
    %51 = arith.addf %49, %50 : vector<104x128xf32>
    %cst_16 = arith.constant 1.000000e-10 : f32
    %52 = vector.broadcast %cst_16 : f32 to vector<104x128xf32>
    %53 = arith.addf %51, %52 : vector<104x128xf32>
    %54 = math.log %53 : vector<104x128xf32>
    %c4 = arith.constant 4 : index
    %c0_17 = arith.constant 0 : index
    %c0_18 = arith.constant 0 : index
    %55 = vector.load %arg3[%c4, %c0_17, %c0_18] : memref<8x104x128xf32, #tpu.memory_space<vmem>>, vector<1x104x128xf32>
    %56 = vector.shape_cast %55 : vector<1x104x128xf32> to vector<104x128xf32>
    %57 = vector.shape_cast %54 : vector<104x128xf32> to vector<1x104x128xf32>
    tpu.vector_store %arg3[%c4, %c0_17, %c0_18], %57 {strides = array<i32>} : memref<8x104x128xf32, #tpu.memory_space<vmem>>, vector<1x104x128xf32>,
    %58 = vector.extract_strided_slice %2 {offsets = [0, 640], sizes = [104, 128], strides = [1, 1]} : vector<208x1024xf32> to vector<104x128xf32>
    %59 = vector.extract_strided_slice %2 {offsets = [104, 640], sizes = [104, 128], strides = [1, 1]} : vector<208x1024xf32> to vector<104x128xf32>
    %60 = arith.mulf %58, %58 : vector<104x128xf32>
    %61 = arith.mulf %59, %59 : vector<104x128xf32>
    %62 = arith.addf %60, %61 : vector<104x128xf32>
    %cst_19 = arith.constant 1.000000e-10 : f32
    %63 = vector.broadcast %cst_19 : f32 to vector<104x128xf32>
    %64 = arith.addf %62, %63 : vector<104x128xf32>
    %65 = math.log %64 : vector<104x128xf32>
    %c5 = arith.constant 5 : index
    %c0_20 = arith.constant 0 : index
    %c0_21 = arith.constant 0 : index
    %66 = vector.load %arg3[%c5, %c0_20, %c0_21] : memref<8x104x128xf32, #tpu.memory_space<vmem>>, vector<1x104x128xf32>
    %67 = vector.shape_cast %66 : vector<1x104x128xf32> to vector<104x128xf32>
    %68 = vector.shape_cast %65 : vector<104x128xf32> to vector<1x104x128xf32>
    tpu.vector_store %arg3[%c5, %c0_20, %c0_21], %68 {strides = array<i32>} : memref<8x104x128xf32, #tpu.memory_space<vmem>>, vector<1x104x128xf32>,
    %69 = vector.extract_strided_slice %2 {offsets = [0, 768], sizes = [104, 128], strides = [1, 1]} : vector<208x1024xf32> to vector<104x128xf32>
    %70 = vector.extract_strided_slice %2 {offsets = [104, 768], sizes = [104, 128], strides = [1, 1]} : vector<208x1024xf32> to vector<104x128xf32>
    %71 = arith.mulf %69, %69 : vector<104x128xf32>
    %72 = arith.mulf %70, %70 : vector<104x128xf32>
    %73 = arith.addf %71, %72 : vector<104x128xf32>
    %cst_22 = arith.constant 1.000000e-10 : f32
    %74 = vector.broadcast %cst_22 : f32 to vector<104x128xf32>
    %75 = arith.addf %73, %74 : vector<104x128xf32>
    %76 = math.log %75 : vector<104x128xf32>
    %c6 = arith.constant 6 : index
    %c0_23 = arith.constant 0 : index
    %c0_24 = arith.constant 0 : index
    %77 = vector.load %arg3[%c6, %c0_23, %c0_24] : memref<8x104x128xf32, #tpu.memory_space<vmem>>, vector<1x104x128xf32>
    %78 = vector.shape_cast %77 : vector<1x104x128xf32> to vector<104x128xf32>
    %79 = vector.shape_cast %76 : vector<104x128xf32> to vector<1x104x128xf32>
    tpu.vector_store %arg3[%c6, %c0_23, %c0_24], %79 {strides = array<i32>} : memref<8x104x128xf32, #tpu.memory_space<vmem>>, vector<1x104x128xf32>,
    %80 = vector.extract_strided_slice %2 {offsets = [0, 896], sizes = [104, 128], strides = [1, 1]} : vector<208x1024xf32> to vector<104x128xf32>
    %81 = vector.extract_strided_slice %2 {offsets = [104, 896], sizes = [104, 128], strides = [1, 1]} : vector<208x1024xf32> to vector<104x128xf32>
    %82 = arith.mulf %80, %80 : vector<104x128xf32>
    %83 = arith.mulf %81, %81 : vector<104x128xf32>
    %84 = arith.addf %82, %83 : vector<104x128xf32>
    %cst_25 = arith.constant 1.000000e-10 : f32
    %85 = vector.broadcast %cst_25 : f32 to vector<104x128xf32>
    %86 = arith.addf %84, %85 : vector<104x128xf32>
    %87 = math.log %86 : vector<104x128xf32>
    %c7 = arith.constant 7 : index
    %c0_26 = arith.constant 0 : index
    %c0_27 = arith.constant 0 : index
    %88 = vector.load %arg3[%c7, %c0_26, %c0_27] : memref<8x104x128xf32, #tpu.memory_space<vmem>>, vector<1x104x128xf32>
    %89 = vector.shape_cast %88 : vector<1x104x128xf32> to vector<104x128xf32>
    %90 = vector.shape_cast %87 : vector<104x128xf32> to vector<1x104x128xf32>
    tpu.vector_store %arg3[%c7, %c0_26, %c0_27], %90 {strides = array<i32>} : memref<8x104x128xf32, #tpu.memory_space<vmem>>, vector<1x104x128xf32>,
    return
  }
  func.func @transform_0(%arg0: i32) -> (i32, i32) {
    %c0_i32 = arith.constant 0 : i32
    %c0_i32_0 = arith.constant 0 : i32
    return %c0_i32, %arg0 : i32, i32
  }
  func.func @transform_1(%arg0: i32) -> (i32, i32) {
    %c0_i32 = arith.constant 0 : i32
    %c0_i32_0 = arith.constant 0 : i32
    %c0_i32_1 = arith.constant 0 : i32
    return %c0_i32, %c0_i32_0 : i32, i32
  }
  func.func @transform_2(%arg0: i32) -> (i32, i32, i32) {
    %c0_i32 = arith.constant 0 : i32
    %c0_i32_0 = arith.constant 0 : i32
    %c0_i32_1 = arith.constant 0 : i32
    return %arg0, %c0_i32, %c0_i32_0 : i32, i32, i32
  }
}

</mosaic_0001>

<llo_original>
// kernel: spectrogram_feature_binary2.1
$region0: #{spectrogram_feature_binary2.1}
  #allocation0 [shape = 'u32[]', space=smem, size = 0x4, offset = 0x4, fixed_abs, tag = 'smem constant byte address 0x4 - core index']
  #allocation1 [shape = 'u32[144,128]{1,0:T(1,128)}', space=vmem, size = 0x12000, scoped, tag = 'internal scratch']
  %s0 = inlined_call_operand.vmem [shape: f32[16,1024], index: 0, kind: input, shape index: {}]
  %s1 = inlined_call_operand.vmem [shape: f32[208,16], index: 1, kind: input, shape index: {}]
  %s2 = inlined_call_operand.vmem [shape: f32[8,104,128], index: 2, kind: output, shape index: {}]
  %s3 = sld [smem:[#allocation0]]
  $region18: #{spectrogram_feature_binary2.1} parent=0
    _
  %s5 = ssub.s32 1, %s3
  %s6 = scalar_select 0, %s5, %s3
  // Predicated region
  $region2: #{spectrogram_feature_binary2.1} parent=0 // pred_check
    _
  $region3: #{spectrogram_feature_binary2.1} parent=0 // pred_check_branch
    %8 = sbr.rel (0) target = $region5
  $region4: #{spectrogram_feature_binary2.1} parent=0 // pred_region
    _
  $region5: #{spectrogram_feature_binary2.1} parent=0 // pred_fallthru
    _
  // Predicated region
  $region6: #{spectrogram_feature_binary2.1} parent=0 // pred_check
    _
  $region7: #{spectrogram_feature_binary2.1} parent=0 // pred_check_branch
    %10 = sbr.rel (0) target = $region9
  $region8: #{spectrogram_feature_binary2.1} parent=0 // pred_region
    _
  $region9: #{spectrogram_feature_binary2.1} parent=0 // pred_fallthru
    _
  %v11 = vld [vmem:[%s1] sm:$0xff]
  %v12 = vld [vmem:[%s1 + $0x8] sm:$0xff]
  %v13 = vld [vmem:[%s1 + $0x10] sm:$0xff]
  %v14 = vld [vmem:[%s1 + $0x18] sm:$0xff]
  %v15 = vld [vmem:[%s1 + $0x20] sm:$0xff]
  %v16 = vld [vmem:[%s1 + $0x28] sm:$0xff]
  %v17 = vld [vmem:[%s1 + $0x30] sm:$0xff]
  %v18 = vld [vmem:[%s1 + $0x38] sm:$0xff]
  %v19 = vld [vmem:[%s1 + $0x40] sm:$0xff]
  %v20 = vld [vmem:[%s1 + $0x48] sm:$0xff]
  %v21 = vld [vmem:[%s1 + $0x50] sm:$0xff]
  %v22 = vld [vmem:[%s1 + $0x58] sm:$0xff]
  %v23 = vld [vmem:[%s1 + $0x60] sm:$0xff]
  %v24 = vld [vmem:[%s1 + $0x68] sm:$0xff]
  %v25 = vld [vmem:[%s1 + $0x70] sm:$0xff]
  %v26 = vld [vmem:[%s1 + $0x78] sm:$0xff]
  %v27 = vld [vmem:[%s1 + $0x80] sm:$0xff]
  %v28 = vld [vmem:[%s1 + $0x88] sm:$0xff]
  %v29 = vld [vmem:[%s1 + $0x90] sm:$0xff]
  %v30 = vld [vmem:[%s1 + $0x98] sm:$0xff]
  %v31 = vld [vmem:[%s1 + $0xa0] sm:$0xff]
  %v32 = vld [vmem:[%s1 + $0xa8] sm:$0xff]
  %v33 = vld [vmem:[%s1 + $0xb0] sm:$0xff]
  %v34 = vld [vmem:[%s1 + $0xb8] sm:$0xff]
  %v35 = vld [vmem:[%s1 + $0xc0] sm:$0xff]
  %v36 = vld [vmem:[%s1 + $0xc8] sm:$0xff]
  %v37 = vld [vmem:[%s0] sm:$0xff]
  %v38 = vld [vmem:[%s0 + $0x8] sm:$0xff]
  %v39 = vld [vmem:[%s0 + $0x10] sm:$0xff]
  %v40 = vld [vmem:[%s0 + $0x18] sm:$0xff]
  %v41 = vld [vmem:[%s0 + $0x20] sm:$0xff]
  %v42 = vld [vmem:[%s0 + $0x28] sm:$0xff]
  %v43 = vld [vmem:[%s0 + $0x30] sm:$0xff]
  %v44 = vld [vmem:[%s0 + $0x38] sm:$0xff]
  %v45 = vld [vmem:[%s0 + $0x40] sm:$0xff]
  %v46 = vld [vmem:[%s0 + $0x48] sm:$0xff]
  %v47 = vld [vmem:[%s0 + $0x50] sm:$0xff]
  %v48 = vld [vmem:[%s0 + $0x58] sm:$0xff]
  %v49 = vld [vmem:[%s0 + $0x60] sm:$0xff]
  %v50 = vld [vmem:[%s0 + $0x68] sm:$0xff]
  %v51 = vld [vmem:[%s0 + $0x70] sm:$0xff]
  %v52 = vld [vmem:[%s0 + $0x78] sm:$0xff]
  %vm53 = vcmask 130048
  %v55 = vsel %vm53, %v11, 0
  %v58 = vsel %vm53, %v12, 0
  %v61 = vsel %vm53, %v13, 0
  %v64 = vsel %vm53, %v14, 0
  %v67 = vsel %vm53, %v15, 0
  %v70 = vsel %vm53, %v16, 0
  %v73 = vsel %vm53, %v17, 0
  %v76 = vsel %vm53, %v18, 0
  %v79 = vsel %vm53, %v19, 0
  %v82 = vsel %vm53, %v20, 0
  %v85 = vsel %vm53, %v21, 0
  %v88 = vsel %vm53, %v22, 0
  %v91 = vsel %vm53, %v23, 0
  %v94 = vsel %vm53, %v24, 0
  %v97 = vsel %vm53, %v25, 0
  %v100 = vsel %vm53, %v26, 0
  %v103 = vsel %vm53, %v27, 0
  %v106 = vsel %vm53, %v28, 0
  %v109 = vsel %vm53, %v29, 0
  %v112 = vsel %vm53, %v30, 0
  %v115 = vsel %vm53, %v31, 0
  %v118 = vsel %vm53, %v32, 0
  %v121 = vsel %vm53, %v33, 0
  %v124 = vsel %vm53, %v34, 0
  %v127 = vsel %vm53, %v35, 0
  %v130 = vsel %vm53, %v36, 0
  %132 = vmatprep.subr.mxu0 %v38
  %133 = vmatpush1.msra.mxu0 %v37
  %134 = vmatprep.subr.mxu0 %v46
  %135 = vmatpush1.msra.mxu0 %v45
  %136 = vmatprep.subr.mxu0 0.0
  %137 = vmatpush1.msra.mxu0 0.0
  %138 = vmatprep.subr.mxu0 0.0
  %139 = vmatpush1.msra.mxu0 0.0
  %140 = vmatprep.subr.mxu0 0.0
  %141 = vmatpush1.msra.mxu0 0.0
  %142 = vmatprep.subr.mxu0 0.0
  %143 = vmatpush1.msra.mxu0 0.0
  %144 = vmatprep.subr.mxu0 0.0
  %145 = vmatpush1.msra.mxu0 0.0
  %146 = vmatprep.subr.mxu0 0.0
  %147 = vmatpush1.msra.mxu0 0.0
  %148 = vmatprep.subr.mxu0 0.0
  %149 = vmatpush1.msra.mxu0 0.0
  %150 = vmatprep.subr.mxu0 0.0
  %151 = vmatpush1.msra.mxu0 0.0
  %152 = vmatprep.subr.mxu0 0.0
  %153 = vmatpush1.msra.mxu0 0.0
  %154 = vmatprep.subr.mxu0 0.0
  %155 = vmatpush1.msra.mxu0 0.0
  %156 = vmatprep.subr.mxu0 0.0
  %157 = vmatpush1.msra.mxu0 0.0
  %158 = vmatprep.subr.mxu0 0.0
  %159 = vmatpush1.msra.mxu0 0.0
  %160 = vmatprep.subr.mxu0 0.0
  %161 = vmatpush1.msra.mxu0 0.0
  %162 = vmatprep.subr.mxu0 0.0
  %163 = vmatpush1.msra.mxu0 0.0
  %164 = vmatprep.subr.mxu0 0.0
  %165 = vmatpush1.msra.mxu0 0.0
  %166 = vmatprep.subr.mxu0 0.0
  %167 = vmatpush1.msra.mxu0 0.0
  %168 = vmatprep.subr.mxu0 0.0
  %169 = vmatpush1.msra.mxu0 0.0
  %170 = vmatprep.subr.mxu0 0.0
  %171 = vmatpush1.msra.mxu0 0.0
  %172 = vmatprep.subr.mxu0 0.0
  %173 = vmatpush1.msra.mxu0 0.0
  %174 = vmatprep.subr.mxu0 0.0
  %175 = vmatpush1.msra.mxu0 0.0
  %176 = vmatprep.subr.mxu0 0.0
  %177 = vmatpush1.msra.mxu0 0.0
  %178 = vmatprep.subr.mxu0 0.0
  %179 = vmatpush1.msra.mxu0 0.0
  %180 = vmatprep.subr.mxu0 0.0
  %181 = vmatpush1.msra.mxu0 0.0
  %182 = vmatprep.subr.mxu0 0.0
  %183 = vmatpush1.msra.mxu0 0.0
  %184 = vmatprep.subr.mxu0 0.0
  %185 = vmatpush1.msra.mxu0 0.0
  %186 = vmatprep.subr.mxu0 0.0
  %187 = vmatpush1.msra.mxu0 0.0
  %188 = vmatprep.subr.mxu0 0.0
  %189 = vmatpush1.msra.mxu0 0.0
  %190 = vmatprep.subr.mxu0 0.0
  %191 = vmatpush1.msra.mxu0 0.0
  %192 = vmatprep.subr.mxu0 0.0
  %193 = vmatpush1.msra.mxu0 0.0
  %194 = vmatprep.subr.mxu0 0.0
  %195 = vmatpush1.msra.mxu0 0.0
  %196 = vmatprep.mubr.f32.mxu0 0.0
  %197 = vmatmul.mubr.f32.gmra.mrb[0].mxu0 %v55
  %v198 = vpop.f32.mrb[0].mxu0
  %v199 = vadd.f32 0.0, %v198
  %v200 = vpop.f32.mrb[0].mxu0
  %v201 = vadd.f32 0.0, %v200
  %202 = vmatprep.mubr.f32.mxu0 0.0
  %203 = vmatmul.mubr.f32.gmra.mrb[0].mxu0 %v58
  %v204 = vpop.f32.mrb[0].mxu0
  %v205 = vadd.f32 0.0, %v204
  %v206 = vpop.f32.mrb[0].mxu0
  %v207 = vadd.f32 0.0, %v206
  %208 = vmatprep.mubr.f32.mxu0 0.0
  %209 = vmatmul.mubr.f32.gmra.mrb[0].mxu0 %v61
  %v210 = vpop.f32.mrb[0].mxu0
  %v211 = vadd.f32 0.0, %v210
  %v212 = vpop.f32.mrb[0].mxu0
  %v213 = vadd.f32 0.0, %v212
  %214 = vmatprep.mubr.f32.mxu0 0.0
  %215 = vmatmul.mubr.f32.gmra.mrb[0].mxu0 %v64
  %v216 = vpop.f32.mrb[0].mxu0
  %v217 = vadd.f32 0.0, %v216
  %v218 = vpop.f32.mrb[0].mxu0
  %v219 = vadd.f32 0.0, %v218
  %220 = vmatprep.mubr.f32.mxu0 0.0
  %221 = vmatmul.mubr.f32.gmra.mrb[0].mxu0 %v67
  %v222 = vpop.f32.mrb[0].mxu0
  %v223 = vadd.f32 0.0, %v222
  %v224 = vpop.f32.mrb[0].mxu0
  %v225 = vadd.f32 0.0, %v224
  %226 = vmatprep.mubr.f32.mxu0 0.0
  %227 = vmatmul.mubr.f32.gmra.mrb[0].mxu0 %v70
  %v228 = vpop.f32.mrb[0].mxu0
  %v229 = vadd.f32 0.0, %v228
  %v230 = vpop.f32.mrb[0].mxu0
  %v231 = vadd.f32 0.0, %v230
  %232 = vmatprep.mubr.f32.mxu0 0.0
  %233 = vmatmul.mubr.f32.gmra.mrb[0].mxu0 %v73
  %v234 = vpop.f32.mrb[0].mxu0
  %v235 = vadd.f32 0.0, %v234
  %v236 = vpop.f32.mrb[0].mxu0
  %v237 = vadd.f32 0.0, %v236
  %238 = vmatprep.mubr.f32.mxu0 0.0
  %239 = vmatmul.mubr.f32.gmra.mrb[0].mxu0 %v76
  %v240 = vpop.f32.mrb[0].mxu0
  %v241 = vadd.f32 0.0, %v240
  %v242 = vpop.f32.mrb[0].mxu0
  %v243 = vadd.f32 0.0, %v242
  %244 = vmatprep.mubr.f32.mxu0 0.0
  %245 = vmatmul.mubr.f32.gmra.mrb[0].mxu0 %v79
  %v246 = vpop.f32.mrb[0].mxu0
  %v247 = vadd.f32 0.0, %v246
  %v248 = vpop.f32.mrb[0].mxu0
  %v249 = vadd.f32 0.0, %v248
  %250 = vmatprep.mubr.f32.mxu0 0.0
  %251 = vmatmul.mubr.f32.gmra.mrb[0].mxu0 %v82
  %v252 = vpop.f32.mrb[0].mxu0
  %v253 = vadd.f32 0.0, %v252
  %v254 = vpop.f32.mrb[0].mxu0
  %v255 = vadd.f32 0.0, %v254
  %256 = vmatprep.mubr.f32.mxu0 0.0
  %257 = vmatmul.mubr.f32.gmra.mrb[0].mxu0 %v85
  %v258 = vpop.f32.mrb[0].mxu0
  %v259 = vadd.f32 0.0, %v258
  %v260 = vpop.f32.mrb[0].mxu0
  %v261 = vadd.f32 0.0, %v260
  %262 = vmatprep.mubr.f32.mxu0 0.0
  %263 = vmatmul.mubr.f32.gmra.mrb[0].mxu0 %v88
  %v264 = vpop.f32.mrb[0].mxu0
  %v265 = vadd.f32 0.0, %v264
  %v266 = vpop.f32.mrb[0].mxu0
  %v267 = vadd.f32 0.0, %v266
  %268 = vmatprep.mubr.f32.mxu0 0.0
  %269 = vmatmul.mubr.f32.gmra.mrb[0].mxu0 %v91
  %v270 = vpop.f32.mrb[0].mxu0
  %v271 = vadd.f32 0.0, %v270
  %v272 = vpop.f32.mrb[0].mxu0
  %v273 = vadd.f32 0.0, %v272
  %274 = vmatprep.mubr.f32.mxu0 0.0
  %275 = vmatmul.mubr.f32.gmra.mrb[0].mxu0 %v94
  %v276 = vpop.f32.mrb[0].mxu0
  %v277 = vadd.f32 0.0, %v276
  %v278 = vpop.f32.mrb[0].mxu0
  %v279 = vadd.f32 0.0, %v278
  %280 = vmatprep.mubr.f32.mxu0 0.0
  %281 = vmatmul.mubr.f32.gmra.mrb[0].mxu0 %v97
  %v282 = vpop.f32.mrb[0].mxu0
  %v283 = vadd.f32 0.0, %v282
  %v284 = vpop.f32.mrb[0].mxu0
  %v285 = vadd.f32 0.0, %v284
  %286 = vmatprep.mubr.f32.mxu0 0.0
  %287 = vmatmul.mubr.f32.gmra.mrb[0].mxu0 %v100
  %v288 = vpop.f32.mrb[0].mxu0
  %v289 = vadd.f32 0.0, %v288
  %v290 = vpop.f32.mrb[0].mxu0
  %v291 = vadd.f32 0.0, %v290
  %292 = vmatprep.mubr.f32.mxu0 0.0
  %293 = vmatmul.mubr.f32.gmra.mrb[0].mxu0 %v103
  %v294 = vpop.f32.mrb[0].mxu0
  %v295 = vadd.f32 0.0, %v294
  %v296 = vpop.f32.mrb[0].mxu0
  %v297 = vadd.f32 0.0, %v296
  %298 = vmatprep.mubr.f32.mxu0 0.0
  %299 = vmatmul.mubr.f32.gmra.mrb[0].mxu0 %v106
  %v300 = vpop.f32.mrb[0].mxu0
  %v301 = vadd.f32 0.0, %v300
  %v302 = vpop.f32.mrb[0].mxu0
  %v303 = vadd.f32 0.0, %v302
  %304 = vmatprep.mubr.f32.mxu0 0.0
  %305 = vmatmul.mubr.f32.gmra.mrb[0].mxu0 %v109
  %v306 = vpop.f32.mrb[0].mxu0
  %v307 = vadd.f32 0.0, %v306
  %v308 = vpop.f32.mrb[0].mxu0
  %v309 = vadd.f32 0.0, %v308
  %310 = vmatprep.mubr.f32.mxu0 0.0
  %311 = vmatmul.mubr.f32.gmra.mrb[0].mxu0 %v112
  %v312 = vpop.f32.mrb[0].mxu0
  %v313 = vadd.f32 0.0, %v312
  %v314 = vpop.f32.mrb[0].mxu0
  %v315 = vadd.f32 0.0, %v314
  %316 = vmatprep.mubr.f32.mxu0 0.0
  %317 = vmatmul.mubr.f32.gmra.mrb[0].mxu0 %v115
  %v318 = vpop.f32.mrb[0].mxu0
  %v319 = vadd.f32 0.0, %v318
  %v320 = vpop.f32.mrb[0].mxu0
  %v321 = vadd.f32 0.0, %v320
  %322 = vmatprep.mubr.f32.mxu0 0.0
  %323 = vmatmul.mubr.f32.gmra.mrb[0].mxu0 %v118
  %v324 = vpop.f32.mrb[0].mxu0
  %v325 = vadd.f32 0.0, %v324
  %v326 = vpop.f32.mrb[0].mxu0
  %v327 = vadd.f32 0.0, %v326
  %328 = vmatprep.mubr.f32.mxu0 0.0
  %329 = vmatmul.mubr.f32.gmra.mrb[0].mxu0 %v121
  %v330 = vpop.f32.mrb[0].mxu0
  %v331 = vadd.f32 0.0, %v330
  %v332 = vpop.f32.mrb[0].mxu0
  %v333 = vadd.f32 0.0, %v332
  %334 = vmatprep.mubr.f32.mxu0 0.0
  %335 = vmatmul.mubr.f32.gmra.mrb[0].mxu0 %v124
  %v336 = vpop.f32.mrb[0].mxu0
  %v337 = vadd.f32 0.0, %v336
  %v338 = vpop.f32.mrb[0].mxu0
  %v339 = vadd.f32 0.0, %v338
  %340 = vmatprep.mubr.f32.mxu0 0.0
  %341 = vmatmul.mubr.f32.gmra.mrb[0].mxu0 %v127
  %v342 = vpop.f32.mrb[0].mxu0
  %v343 = vadd.f32 0.0, %v342
  %v344 = vpop.f32.mrb[0].mxu0
  %v345 = vadd.f32 0.0, %v344
  %346 = vmatprep.mubr.f32.mxu0 0.0
  %347 = vmatmul.mubr.f32.gmra.mrb[0].mxu0 %v130
  %v348 = vpop.f32.mrb[0].mxu0
  %v349 = vadd.f32 0.0, %v348
  %v350 = vpop.f32.mrb[0].mxu0
  %v351 = vadd.f32 0.0, %v350
  %352 = vdwg.mxu0
  %353 = vmatprep.subr.mxu0 %v40
  %354 = vmatpush1.msra.mxu0 %v39
  %355 = vmatprep.subr.mxu0 %v48
  %356 = vmatpush1.msra.mxu0 %v47
  %357 = vmatprep.subr.mxu0 0.0
  %358 = vmatpush1.msra.mxu0 0.0
  %359 = vmatprep.subr.mxu0 0.0
  %360 = vmatpush1.msra.mxu0 0.0
  %361 = vmatprep.subr.mxu0 0.0
  %362 = vmatpush1.msra.mxu0 0.0
  %363 = vmatprep.subr.mxu0 0.0
  %364 = vmatpush1.msra.mxu0 0.0
  %365 = vmatprep.subr.mxu0 0.0
  %366 = vmatpush1.msra.mxu0 0.0
  %367 = vmatprep.subr.mxu0 0.0
  %368 = vmatpush1.msra.mxu0 0.0
  %369 = vmatprep.subr.mxu0 0.0
  %370 = vmatpush1.msra.mxu0 0.0
  %371 = vmatprep.subr.mxu0 0.0
  %372 = vmatpush1.msra.mxu0 0.0
  %373 = vmatprep.subr.mxu0 0.0
  %374 = vmatpush1.msra.mxu0 0.0
  %375 = vmatprep.subr.mxu0 0.0
  %376 = vmatpush1.msra.mxu0 0.0
  %377 = vmatprep.subr.mxu0 0.0
  %378 = vmatpush1.msra.mxu0 0.0
  %379 = vmatprep.subr.mxu0 0.0
  %380 = vmatpush1.msra.mxu0 0.0
  %381 = vmatprep.subr.mxu0 0.0
  %382 = vmatpush1.msra.mxu0 0.0
  %383 = vmatprep.subr.mxu0 0.0
  %384 = vmatpush1.msra.mxu0 0.0
  %385 = vmatprep.subr.mxu0 0.0
  %386 = vmatpush1.msra.mxu0 0.0
  %387 = vmatprep.subr.mxu0 0.0
  %388 = vmatpush1.msra.mxu0 0.0
  %389 = vmatprep.subr.mxu0 0.0
  %390 = vmatpush1.msra.mxu0 0.0
  %391 = vmatprep.subr.mxu0 0.0
  %392 = vmatpush1.msra.mxu0 0.0
  %393 = vmatprep.subr.mxu0 0.0
  %394 = vmatpush1.msra.mxu0 0.0
  %395 = vmatprep.subr.mxu0 0.0
  %396 = vmatpush1.msra.mxu0 0.0
  %397 = vmatprep.subr.mxu0 0.0
  %398 = vmatpush1.msra.mxu0 0.0
  %399 = vmatprep.subr.mxu0 0.0
  %400 = vmatpush1.msra.mxu0 0.0
  %401 = vmatprep.subr.mxu0 0.0
  %402 = vmatpush1.msra.mxu0 0.0
  %403 = vmatprep.subr.mxu0 0.0
  %404 = vmatpush1.msra.mxu0 0.0
  %405 = vmatprep.subr.mxu0 0.0
  %406 = vmatpush1.msra.mxu0 0.0
  %407 = vmatprep.subr.mxu0 0.0
  %408 = vmatpush1.msra.mxu0 0.0
  %409 = vmatprep.subr.mxu0 0.0
  %410 = vmatpush1.msra.mxu0 0.0
  %411 = vmatprep.subr.mxu0 0.0
  %412 = vmatpush1.msra.mxu0 0.0
  %413 = vmatprep.subr.mxu0 0.0
  %414 = vmatpush1.msra.mxu0 0.0
  %415 = vmatprep.subr.mxu0 0.0
  %416 = vmatpush1.msra.mxu0 0.0
  %417 = vmatprep.mubr.f32.mxu0 0.0
  %418 = vmatmul.mubr.f32.gmra.mrb[0].mxu0 %v55
  %v419 = vpop.f32.mrb[0].mxu0
  %v420 = vadd.f32 0.0, %v419
  %v421 = vpop.f32.mrb[0].mxu0
  %v422 = vadd.f32 0.0, %v421
  %423 = vmatprep.mubr.f32.mxu0 0.0
  %424 = vmatmul.mubr.f32.gmra.mrb[0].mxu0 %v58
  %v425 = vpop.f32.mrb[0].mxu0
  %v426 = vadd.f32 0.0, %v425
  %v427 = vpop.f32.mrb[0].mxu0
  %v428 = vadd.f32 0.0, %v427
  %429 = vmatprep.mubr.f32.mxu0 0.0
  %430 = vmatmul.mubr.f32.gmra.mrb[0].mxu0 %v61
  %v431 = vpop.f32.mrb[0].mxu0
  %v432 = vadd.f32 0.0, %v431
  %v433 = vpop.f32.mrb[0].mxu0
  %v434 = vadd.f32 0.0, %v433
  %435 = vmatprep.mubr.f32.mxu0 0.0
  %436 = vmatmul.mubr.f32.gmra.mrb[0].mxu0 %v64
  %v437 = vpop.f32.mrb[0].mxu0
  %v438 = vadd.f32 0.0, %v437
  %v439 = vpop.f32.mrb[0].mxu0
  %v440 = vadd.f32 0.0, %v439
  %441 = vmatprep.mubr.f32.mxu0 0.0
  %442 = vmatmul.mubr.f32.gmra.mrb[0].mxu0 %v67
  %v443 = vpop.f32.mrb[0].mxu0
  %v444 = vadd.f32 0.0, %v443
  %v445 = vpop.f32.mrb[0].mxu0
  %v446 = vadd.f32 0.0, %v445
  %447 = vmatprep.mubr.f32.mxu0 0.0
  %448 = vmatmul.mubr.f32.gmra.mrb[0].mxu0 %v70
  %v449 = vpop.f32.mrb[0].mxu0
  %v450 = vadd.f32 0.0, %v449
  %v451 = vpop.f32.mrb[0].mxu0
  %v452 = vadd.f32 0.0, %v451
  %453 = vmatprep.mubr.f32.mxu0 0.0
  %454 = vmatmul.mubr.f32.gmra.mrb[0].mxu0 %v73
  %v455 = vpop.f32.mrb[0].mxu0
  %v456 = vadd.f32 0.0, %v455
  %v457 = vpop.f32.mrb[0].mxu0
  %v458 = vadd.f32 0.0, %v457
  %459 = vmatprep.mubr.f32.mxu0 0.0
  %460 = vmatmul.mubr.f32.gmra.mrb[0].mxu0 %v76
  %v461 = vpop.f32.mrb[0].mxu0
  %v462 = vadd.f32 0.0, %v461
  %v463 = vpop.f32.mrb[0].mxu0
  %v464 = vadd.f32 0.0, %v463
  %465 = vmatprep.mubr.f32.mxu0 0.0
  %466 = vmatmul.mubr.f32.gmra.mrb[0].mxu0 %v79
  %v467 = vpop.f32.mrb[0].mxu0
  %v468 = vadd.f32 0.0, %v467
  %v469 = vpop.f32.mrb[0].mxu0
  %v470 = vadd.f32 0.0, %v469
  %471 = vmatprep.mubr.f32.mxu0 0.0
  %472 = vmatmul.mubr.f32.gmra.mrb[0].mxu0 %v82
  %v473 = vpop.f32.mrb[0].mxu0
  %v474 = vadd.f32 0.0, %v473
  %v475 = vpop.f32.mrb[0].mxu0
  %v476 = vadd.f32 0.0, %v475
  %477 = vmatprep.mubr.f32.mxu0 0.0
  %478 = vmatmul.mubr.f32.gmra.mrb[0].mxu0 %v85
  %v479 = vpop.f32.mrb[0].mxu0
  %v480 = vadd.f32 0.0, %v479
  %v481 = vpop.f32.mrb[0].mxu0
  %v482 = vadd.f32 0.0, %v481
  %483 = vmatprep.mubr.f32.mxu0 0.0
  %484 = vmatmul.mubr.f32.gmra.mrb[0].mxu0 %v88
  %v485 = vpop.f32.mrb[0].mxu0
  %v486 = vadd.f32 0.0, %v485
  %v487 = vpop.f32.mrb[0].mxu0
  %v488 = vadd.f32 0.0, %v487
  %489 = vmatprep.mubr.f32.mxu0 0.0
  %490 = vmatmul.mubr.f32.gmra.mrb[0].mxu0 %v91
  %v491 = vpop.f32.mrb[0].mxu0
  %v492 = vadd.f32 0.0, %v491
  %v493 = vpop.f32.mrb[0].mxu0
  %v494 = vadd.f32 0.0, %v493
  %495 = vmatprep.mubr.f32.mxu0 0.0
  %496 = vmatmul.mubr.f32.gmra.mrb[0].mxu0 %v94
  %v497 = vpop.f32.mrb[0].mxu0
  %v498 = vadd.f32 0.0, %v497
  %v499 = vpop.f32.mrb[0].mxu0
  %v500 = vadd.f32 0.0, %v499
  %501 = vmatprep.mubr.f32.mxu0 0.0
  %502 = vmatmul.mubr.f32.gmra.mrb[0].mxu0 %v97
  %v503 = vpop.f32.mrb[0].mxu0
  %v504 = vadd.f32 0.0, %v503
  %v505 = vpop.f32.mrb[0].mxu0
  %v506 = vadd.f32 0.0, %v505
  %507 = vmatprep.mubr.f32.mxu0 0.0
  %508 = vmatmul.mubr.f32.gmra.mrb[0].mxu0 %v100
  %v509 = vpop.f32.mrb[0].mxu0
  %v510 = vadd.f32 0.0, %v509
  %v511 = vpop.f32.mrb[0].mxu0
  %v512 = vadd.f32 0.0, %v511
  %513 = vmatprep.mubr.f32.mxu0 0.0
  %514 = vmatmul.mubr.f32.gmra.mrb[0].mxu0 %v103
  %v515 = vpop.f32.mrb[0].mxu0
  %v516 = vadd.f32 0.0, %v515
  %v517 = vpop.f32.mrb[0].mxu0
  %v518 = vadd.f32 0.0, %v517
  %519 = vmatprep.mubr.f32.mxu0 0.0
  %520 = vmatmul.mubr.f32.gmra.mrb[0].mxu0 %v106
  %v521 = vpop.f32.mrb[0].mxu0
  %v522 = vadd.f32 0.0, %v521
  %v523 = vpop.f32.mrb[0].mxu0
  %v524 = vadd.f32 0.0, %v523
  %525 = vmatprep.mubr.f32.mxu0 0.0
  %526 = vmatmul.mubr.f32.gmra.mrb[0].mxu0 %v109
  %v527 = vpop.f32.mrb[0].mxu0
  %v528 = vadd.f32 0.0, %v527
  %v529 = vpop.f32.mrb[0].mxu0
  %v530 = vadd.f32 0.0, %v529
  %531 = vmatprep.mubr.f32.mxu0 0.0
  %532 = vmatmul.mubr.f32.gmra.mrb[0].mxu0 %v112
  %v533 = vpop.f32.mrb[0].mxu0
  %v534 = vadd.f32 0.0, %v533
  %v535 = vpop.f32.mrb[0].mxu0
  %v536 = vadd.f32 0.0, %v535
  %537 = vmatprep.mubr.f32.mxu0 0.0
  %538 = vmatmul.mubr.f32.gmra.mrb[0].mxu0 %v115
  %v539 = vpop.f32.mrb[0].mxu0
  %v540 = vadd.f32 0.0, %v539
  %v541 = vpop.f32.mrb[0].mxu0
  %v542 = vadd.f32 0.0, %v541
  %543 = vmatprep.mubr.f32.mxu0 0.0
  %544 = vmatmul.mubr.f32.gmra.mrb[0].mxu0 %v118
  %v545 = vpop.f32.mrb[0].mxu0
  %v546 = vadd.f32 0.0, %v545
  %v547 = vpop.f32.mrb[0].mxu0
  %v548 = vadd.f32 0.0, %v547
  %549 = vmatprep.mubr.f32.mxu0 0.0
  %550 = vmatmul.mubr.f32.gmra.mrb[0].mxu0 %v121
  %v551 = vpop.f32.mrb[0].mxu0
  %v552 = vadd.f32 0.0, %v551
  %v553 = vpop.f32.mrb[0].mxu0
  %v554 = vadd.f32 0.0, %v553
  %555 = vmatprep.mubr.f32.mxu0 0.0
  %556 = vmatmul.mubr.f32.gmra.mrb[0].mxu0 %v124
  %v557 = vpop.f32.mrb[0].mxu0
  %v558 = vadd.f32 0.0, %v557
  %v559 = vpop.f32.mrb[0].mxu0
  %v560 = vadd.f32 0.0, %v559
  %561 = vmatprep.mubr.f32.mxu0 0.0
  %562 = vmatmul.mubr.f32.gmra.mrb[0].mxu0 %v127
  %v563 = vpop.f32.mrb[0].mxu0
  %v564 = vadd.f32 0.0, %v563
  %v565 = vpop.f32.mrb[0].mxu0
  %v566 = vadd.f32 0.0, %v565
  %567 = vmatprep.mubr.f32.mxu0 0.0
  %568 = vmatmul.mubr.f32.gmra.mrb[0].mxu0 %v130
  %v569 = vpop.f32.mrb[0].mxu0
  %v570 = vadd.f32 0.0, %v569
  %v571 = vpop.f32.mrb[0].mxu0
  %v572 = vadd.f32 0.0, %v571
  %573 = vdwg.mxu0
  %574 = vmatprep.subr.mxu0 %v42
  %575 = vmatpush1.msra.mxu0 %v41
  %576 = vmatprep.subr.mxu0 %v50
  %577 = vmatpush1.msra.mxu0 %v49
  %578 = vmatprep.subr.mxu0 0.0
  %579 = vmatpush1.msra.mxu0 0.0
  %580 = vmatprep.subr.mxu0 0.0
  %581 = vmatpush1.msra.mxu0 0.0
  %582 = vmatprep.subr.mxu0 0.0
  %583 = vmatpush1.msra.mxu0 0.0
  %584 = vmatprep.subr.mxu0 0.0
  %585 = vmatpush1.msra.mxu0 0.0
  %586 = vmatprep.subr.mxu0 0.0
  %587 = vmatpush1.msra.mxu0 0.0
  %588 = vmatprep.subr.mxu0 0.0
  %589 = vmatpush1.msra.mxu0 0.0
  %590 = vmatprep.subr.mxu0 0.0
  %591 = vmatpush1.msra.mxu0 0.0
  %592 = vmatprep.subr.mxu0 0.0
  %593 = vmatpush1.msra.mxu0 0.0
  %594 = vmatprep.subr.mxu0 0.0
  %595 = vmatpush1.msra.mxu0 0.0
  %596 = vmatprep.subr.mxu0 0.0
  %597 = vmatpush1.msra.mxu0 0.0
  %598 = vmatprep.subr.mxu0 0.0
  %599 = vmatpush1.msra.mxu0 0.0
  %600 = vmatprep.subr.mxu0 0.0
  %601 = vmatpush1.msra.mxu0 0.0
  %602 = vmatprep.subr.mxu0 0.0
  %603 = vmatpush1.msra.mxu0 0.0
  %604 = vmatprep.subr.mxu0 0.0
  %605 = vmatpush1.msra.mxu0 0.0
  %606 = vmatprep.subr.mxu0 0.0
  %607 = vmatpush1.msra.mxu0 0.0
  %608 = vmatprep.subr.mxu0 0.0
  %609 = vmatpush1.msra.mxu0 0.0
  %610 = vmatprep.subr.mxu0 0.0
  %611 = vmatpush1.msra.mxu0 0.0
  %612 = vmatprep.subr.mxu0 0.0
  %613 = vmatpush1.msra.mxu0 0.0
  %614 = vmatprep.subr.mxu0 0.0
  %615 = vmatpush1.msra.mxu0 0.0
  %616 = vmatprep.subr.mxu0 0.0
  %617 = vmatpush1.msra.mxu0 0.0
  %618 = vmatprep.subr.mxu0 0.0
  %619 = vmatpush1.msra.mxu0 0.0
  %620 = vmatprep.subr.mxu0 0.0
  %621 = vmatpush1.msra.mxu0 0.0
  %622 = vmatprep.subr.mxu0 0.0
  %623 = vmatpush1.msra.mxu0 0.0
  %624 = vmatprep.subr.mxu0 0.0
  %625 = vmatpush1.msra.mxu0 0.0
  %626 = vmatprep.subr.mxu0 0.0
  %627 = vmatpush1.msra.mxu0 0.0
  %628 = vmatprep.subr.mxu0 0.0
  %629 = vmatpush1.msra.mxu0 0.0
  %630 = vmatprep.subr.mxu0 0.0
  %631 = vmatpush1.msra.mxu0 0.0
  %632 = vmatprep.subr.mxu0 0.0
  %633 = vmatpush1.msra.mxu0 0.0
  %634 = vmatprep.subr.mxu0 0.0
  %635 = vmatpush1.msra.mxu0 0.0
  %636 = vmatprep.subr.mxu0 0.0
  %637 = vmatpush1.msra.mxu0 0.0
  %638 = vmatprep.mubr.f32.mxu0 0.0
  %639 = vmatmul.mubr.f32.gmra.mrb[0].mxu0 %v55
  %v640 = vpop.f32.mrb[0].mxu0
  %v641 = vadd.f32 0.0, %v640
  %v642 = vpop.f32.mrb[0].mxu0
  %v643 = vadd.f32 0.0, %v642
  %644 = vmatprep.mubr.f32.mxu0 0.0
  %645 = vmatmul.mubr.f32.gmra.mrb[0].mxu0 %v58
  %v646 = vpop.f32.mrb[0].mxu0
  %v647 = vadd.f32 0.0, %v646
  %v648 = vpop.f32.mrb[0].mxu0
  %v649 = vadd.f32 0.0, %v648
  %650 = vmatprep.mubr.f32.mxu0 0.0
  %651 = vmatmul.mubr.f32.gmra.mrb[0].mxu0 %v61
  %v652 = vpop.f32.mrb[0].mxu0
  %v653 = vadd.f32 0.0, %v652
  %v654 = vpop.f32.mrb[0].mxu0
  %v655 = vadd.f32 0.0, %v654
  %656 = vmatprep.mubr.f32.mxu0 0.0
  %657 = vmatmul.mubr.f32.gmra.mrb[0].mxu0 %v64
  %v658 = vpop.f32.mrb[0].mxu0
  %v659 = vadd.f32 0.0, %v658
  %v660 = vpop.f32.mrb[0].mxu0
  %v661 = vadd.f32 0.0, %v660
  %662 = vmatprep.mubr.f32.mxu0 0.0
  %663 = vmatmul.mubr.f32.gmra.mrb[0].mxu0 %v67
  %v664 = vpop.f32.mrb[0].mxu0
  %v665 = vadd.f32 0.0, %v664
  %v666 = vpop.f32.mrb[0].mxu0
  %v667 = vadd.f32 0.0, %v666
  %668 = vmatprep.mubr.f32.mxu0 0.0
  %669 = vmatmul.mubr.f32.gmra.mrb[0].mxu0 %v70
  %v670 = vpop.f32.mrb[0].mxu0
  %v671 = vadd.f32 0.0, %v670
  %v672 = vpop.f32.mrb[0].mxu0
  %v673 = vadd.f32 0.0, %v672
  %674 = vmatprep.mubr.f32.mxu0 0.0
  %675 = vmatmul.mubr.f32.gmra.mrb[0].mxu0 %v73
  %v676 = vpop.f32.mrb[0].mxu0
  %v677 = vadd.f32 0.0, %v676
  %v678 = vpop.f32.mrb[0].mxu0
  %v679 = vadd.f32 0.0, %v678
  %680 = vmatprep.mubr.f32.mxu0 0.0
  %681 = vmatmul.mubr.f32.gmra.mrb[0].mxu0 %v76
  %v682 = vpop.f32.mrb[0].mxu0
  %v683 = vadd.f32 0.0, %v682
  %v684 = vpop.f32.mrb[0].mxu0
  %v685 = vadd.f32 0.0, %v684
  %686 = vmatprep.mubr.f32.mxu0 0.0
  %687 = vmatmul.mubr.f32.gmra.mrb[0].mxu0 %v79
  %v688 = vpop.f32.mrb[0].mxu0
  %v689 = vadd.f32 0.0, %v688
  %v690 = vpop.f32.mrb[0].mxu0
  %v691 = vadd.f32 0.0, %v690
  %692 = vmatprep.mubr.f32.mxu0 0.0
  %693 = vmatmul.mubr.f32.gmra.mrb[0].mxu0 %v82
  %v694 = vpop.f32.mrb[0].mxu0
  %v695 = vadd.f32 0.0, %v694
  %v696 = vpop.f32.mrb[0].mxu0
  %v697 = vadd.f32 0.0, %v696
  %698 = vmatprep.mubr.f32.mxu0 0.0
  %699 = vmatmul.mubr.f32.gmra.mrb[0].mxu0 %v85
  %v700 = vpop.f32.mrb[0].mxu0
  %v701 = vadd.f32 0.0, %v700
  %v702 = vpop.f32.mrb[0].mxu0
  %v703 = vadd.f32 0.0, %v702
  %704 = vmatprep.mubr.f32.mxu0 0.0
  %705 = vmatmul.mubr.f32.gmra.mrb[0].mxu0 %v88
  %v706 = vpop.f32.mrb[0].mxu0
  %v707 = vadd.f32 0.0, %v706
  %v708 = vpop.f32.mrb[0].mxu0
  %v709 = vadd.f32 0.0, %v708
  %710 = vmatprep.mubr.f32.mxu0 0.0
  %711 = vmatmul.mubr.f32.gmra.mrb[0].mxu0 %v91
  %v712 = vpop.f32.mrb[0].mxu0
  %v713 = vadd.f32 0.0, %v712
  %v714 = vpop.f32.mrb[0].mxu0
  %v715 = vadd.f32 0.0, %v714
  %716 = vmatprep.mubr.f32.mxu0 0.0
  %717 = vmatmul.mubr.f32.gmra.mrb[0].mxu0 %v94
  %v718 = vpop.f32.mrb[0].mxu0
  %v719 = vadd.f32 0.0, %v718
  %v720 = vpop.f32.mrb[0].mxu0
  %v721 = vadd.f32 0.0, %v720
  %722 = vmatprep.mubr.f32.mxu0 0.0
  %723 = vmatmul.mubr.f32.gmra.mrb[0].mxu0 %v97
  %v724 = vpop.f32.mrb[0].mxu0
  %v725 = vadd.f32 0.0, %v724
  %v726 = vpop.f32.mrb[0].mxu0
  %v727 = vadd.f32 0.0, %v726
  %728 = vmatprep.mubr.f32.mxu0 0.0
  %729 = vmatmul.mubr.f32.gmra.mrb[0].mxu0 %v100
  %v730 = vpop.f32.mrb[0].mxu0
  %v731 = vadd.f32 0.0, %v730
  %v732 = vpop.f32.mrb[0].mxu0
  %v733 = vadd.f32 0.0, %v732
  %734 = vmatprep.mubr.f32.mxu0 0.0
  %735 = vmatmul.mubr.f32.gmra.mrb[0].mxu0 %v103
  %v736 = vpop.f32.mrb[0].mxu0
  %v737 = vadd.f32 0.0, %v736
  %v738 = vpop.f32.mrb[0].mxu0
  %v739 = vadd.f32 0.0, %v738
  %740 = vmatprep.mubr.f32.mxu0 0.0
  %741 = vmatmul.mubr.f32.gmra.mrb[0].mxu0 %v106
  %v742 = vpop.f32.mrb[0].mxu0
  %v743 = vadd.f32 0.0, %v742
  %v744 = vpop.f32.mrb[0].mxu0
  %v745 = vadd.f32 0.0, %v744
  %746 = vmatprep.mubr.f32.mxu0 0.0
  %747 = vmatmul.mubr.f32.gmra.mrb[0].mxu0 %v109
  %v748 = vpop.f32.mrb[0].mxu0
  %v749 = vadd.f32 0.0, %v748
  %v750 = vpop.f32.mrb[0].mxu0
  %v751 = vadd.f32 0.0, %v750
  %752 = vmatprep.mubr.f32.mxu0 0.0
  %753 = vmatmul.mubr.f32.gmra.mrb[0].mxu0 %v112
  %v754 = vpop.f32.mrb[0].mxu0
  %v755 = vadd.f32 0.0, %v754
  %v756 = vpop.f32.mrb[0].mxu0
  %v757 = vadd.f32 0.0, %v756
  %758 = vmatprep.mubr.f32.mxu0 0.0
  %759 = vmatmul.mubr.f32.gmra.mrb[0].mxu0 %v115
  %v760 = vpop.f32.mrb[0].mxu0
  %v761 = vadd.f32 0.0, %v760
  %v762 = vpop.f32.mrb[0].mxu0
  %v763 = vadd.f32 0.0, %v762
  %764 = vmatprep.mubr.f32.mxu0 0.0
  %765 = vmatmul.mubr.f32.gmra.mrb[0].mxu0 %v118
  %v766 = vpop.f32.mrb[0].mxu0
  %v767 = vadd.f32 0.0, %v766
  %v768 = vpop.f32.mrb[0].mxu0
  %v769 = vadd.f32 0.0, %v768
  %770 = vmatprep.mubr.f32.mxu0 0.0
  %771 = vmatmul.mubr.f32.gmra.mrb[0].mxu0 %v121
  %v772 = vpop.f32.mrb[0].mxu0
  %v773 = vadd.f32 0.0, %v772
  %v774 = vpop.f32.mrb[0].mxu0
  %v775 = vadd.f32 0.0, %v774
  %776 = vmatprep.mubr.f32.mxu0 0.0
  %777 = vmatmul.mubr.f32.gmra.mrb[0].mxu0 %v124
  %v778 = vpop.f32.mrb[0].mxu0
  %v779 = vadd.f32 0.0, %v778
  %v780 = vpop.f32.mrb[0].mxu0
  %v781 = vadd.f32 0.0, %v780
  %782 = vmatprep.mubr.f32.mxu0 0.0
  %783 = vmatmul.mubr.f32.gmra.mrb[0].mxu0 %v127
  %v784 = vpop.f32.mrb[0].mxu0
  %v785 = vadd.f32 0.0, %v784
  %v786 = vpop.f32.mrb[0].mxu0
  %v787 = vadd.f32 0.0, %v786
  %788 = vmatprep.mubr.f32.mxu0 0.0
  %789 = vmatmul.mubr.f32.gmra.mrb[0].mxu0 %v130
  %v790 = vpop.f32.mrb[0].mxu0
  %v791 = vadd.f32 0.0, %v790
  %v792 = vpop.f32.mrb[0].mxu0
  %v793 = vadd.f32 0.0, %v792
  %794 = vdwg.mxu0
  %795 = vmatprep.subr.mxu0 %v44
  %796 = vmatpush1.msra.mxu0 %v43
  %797 = vmatprep.subr.mxu0 %v52
  %798 = vmatpush1.msra.mxu0 %v51
  %799 = vmatprep.subr.mxu0 0.0
  %800 = vmatpush1.msra.mxu0 0.0
  %801 = vmatprep.subr.mxu0 0.0
  %802 = vmatpush1.msra.mxu0 0.0
  %803 = vmatprep.subr.mxu0 0.0
  %804 = vmatpush1.msra.mxu0 0.0
  %805 = vmatprep.subr.mxu0 0.0
  %806 = vmatpush1.msra.mxu0 0.0
  %807 = vmatprep.subr.mxu0 0.0
  %808 = vmatpush1.msra.mxu0 0.0
  %809 = vmatprep.subr.mxu0 0.0
  %810 = vmatpush1.msra.mxu0 0.0
  %811 = vmatprep.subr.mxu0 0.0
  %812 = vmatpush1.msra.mxu0 0.0
  %813 = vmatprep.subr.mxu0 0.0
  %814 = vmatpush1.msra.mxu0 0.0
  %815 = vmatprep.subr.mxu0 0.0
  %816 = vmatpush1.msra.mxu0 0.0
  %817 = vmatprep.subr.mxu0 0.0
  %818 = vmatpush1.msra.mxu0 0.0
  %819 = vmatprep.subr.mxu0 0.0
  %820 = vmatpush1.msra.mxu0 0.0
  %821 = vmatprep.subr.mxu0 0.0
  %822 = vmatpush1.msra.mxu0 0.0
  %823 = vmatprep.subr.mxu0 0.0
  %824 = vmatpush1.msra.mxu0 0.0
  %825 = vmatprep.subr.mxu0 0.0
  %826 = vmatpush1.msra.mxu0 0.0
  %827 = vmatprep.subr.mxu0 0.0
  %828 = vmatpush1.msra.mxu0 0.0
  %829 = vmatprep.subr.mxu0 0.0
  %830 = vmatpush1.msra.mxu0 0.0
  %831 = vmatprep.subr.mxu0 0.0
  %832 = vmatpush1.msra.mxu0 0.0
  %833 = vmatprep.subr.mxu0 0.0
  %834 = vmatpush1.msra.mxu0 0.0
  %835 = vmatprep.subr.mxu0 0.0
  %836 = vmatpush1.msra.mxu0 0.0
  %837 = vmatprep.subr.mxu0 0.0
  %838 = vmatpush1.msra.mxu0 0.0
  %839 = vmatprep.subr.mxu0 0.0
  %840 = vmatpush1.msra.mxu0 0.0
  %841 = vmatprep.subr.mxu0 0.0
  %842 = vmatpush1.msra.mxu0 0.0
  %843 = vmatprep.subr.mxu0 0.0
  %844 = vmatpush1.msra.mxu0 0.0
  %845 = vmatprep.subr.mxu0 0.0
  %846 = vmatpush1.msra.mxu0 0.0
  %847 = vmatprep.subr.mxu0 0.0
  %848 = vmatpush1.msra.mxu0 0.0
  %849 = vmatprep.subr.mxu0 0.0
  %850 = vmatpush1.msra.mxu0 0.0
  %851 = vmatprep.subr.mxu0 0.0
  %852 = vmatpush1.msra.mxu0 0.0
  %853 = vmatprep.subr.mxu0 0.0
  %854 = vmatpush1.msra.mxu0 0.0
  %855 = vmatprep.subr.mxu0 0.0
  %856 = vmatpush1.msra.mxu0 0.0
  %857 = vmatprep.subr.mxu0 0.0
  %858 = vmatpush1.msra.mxu0 0.0
  %859 = vmatprep.mubr.f32.mxu0 0.0
  %860 = vmatmul.mubr.f32.gmra.mrb[0].mxu0 %v55
  %v861 = vpop.f32.mrb[0].mxu0
  %v862 = vadd.f32 0.0, %v861
  %v863 = vpop.f32.mrb[0].mxu0
  %v864 = vadd.f32 0.0, %v863
  %865 = vmatprep.mubr.f32.mxu0 0.0
  %866 = vmatmul.mubr.f32.gmra.mrb[0].mxu0 %v58
  %v867 = vpop.f32.mrb[0].mxu0
  %v868 = vadd.f32 0.0, %v867
  %v869 = vpop.f32.mrb[0].mxu0
  %v870 = vadd.f32 0.0, %v869
  %871 = vmatprep.mubr.f32.mxu0 0.0
  %872 = vmatmul.mubr.f32.gmra.mrb[0].mxu0 %v61
  %v873 = vpop.f32.mrb[0].mxu0
  %v874 = vadd.f32 0.0, %v873
  %v875 = vpop.f32.mrb[0].mxu0
  %v876 = vadd.f32 0.0, %v875
  %877 = vmatprep.mubr.f32.mxu0 0.0
  %878 = vmatmul.mubr.f32.gmra.mrb[0].mxu0 %v64
  %v879 = vpop.f32.mrb[0].mxu0
  %v880 = vadd.f32 0.0, %v879
  %v881 = vpop.f32.mrb[0].mxu0
  %v882 = vadd.f32 0.0, %v881
  %883 = vmatprep.mubr.f32.mxu0 0.0
  %884 = vmatmul.mubr.f32.gmra.mrb[0].mxu0 %v67
  %v885 = vpop.f32.mrb[0].mxu0
  %v886 = vadd.f32 0.0, %v885
  %v887 = vpop.f32.mrb[0].mxu0
  %v888 = vadd.f32 0.0, %v887
  %889 = vmatprep.mubr.f32.mxu0 0.0
  %890 = vmatmul.mubr.f32.gmra.mrb[0].mxu0 %v70
  %v891 = vpop.f32.mrb[0].mxu0
  %v892 = vadd.f32 0.0, %v891
  %v893 = vpop.f32.mrb[0].mxu0
  %v894 = vadd.f32 0.0, %v893
  %895 = vmatprep.mubr.f32.mxu0 0.0
  %896 = vmatmul.mubr.f32.gmra.mrb[0].mxu0 %v73
  %v897 = vpop.f32.mrb[0].mxu0
  %v898 = vadd.f32 0.0, %v897
  %v899 = vpop.f32.mrb[0].mxu0
  %v900 = vadd.f32 0.0, %v899
  %901 = vmatprep.mubr.f32.mxu0 0.0
  %902 = vmatmul.mubr.f32.gmra.mrb[0].mxu0 %v76
  %v903 = vpop.f32.mrb[0].mxu0
  %v904 = vadd.f32 0.0, %v903
  %v905 = vpop.f32.mrb[0].mxu0
  %v906 = vadd.f32 0.0, %v905
  %907 = vmatprep.mubr.f32.mxu0 0.0
  %908 = vmatmul.mubr.f32.gmra.mrb[0].mxu0 %v79
  %v909 = vpop.f32.mrb[0].mxu0
  %v910 = vadd.f32 0.0, %v909
  %v911 = vpop.f32.mrb[0].mxu0
  %v912 = vadd.f32 0.0, %v911
  %913 = vmatprep.mubr.f32.mxu0 0.0
  %914 = vmatmul.mubr.f32.gmra.mrb[0].mxu0 %v82
  %v915 = vpop.f32.mrb[0].mxu0
  %v916 = vadd.f32 0.0, %v915
  %v917 = vpop.f32.mrb[0].mxu0
  %v918 = vadd.f32 0.0, %v917
  %919 = vmatprep.mubr.f32.mxu0 0.0
  %920 = vmatmul.mubr.f32.gmra.mrb[0].mxu0 %v85
  %v921 = vpop.f32.mrb[0].mxu0
  %v922 = vadd.f32 0.0, %v921
  %v923 = vpop.f32.mrb[0].mxu0
  %v924 = vadd.f32 0.0, %v923
  %925 = vmatprep.mubr.f32.mxu0 0.0
  %926 = vmatmul.mubr.f32.gmra.mrb[0].mxu0 %v88
  %v927 = vpop.f32.mrb[0].mxu0
  %v928 = vadd.f32 0.0, %v927
  %v929 = vpop.f32.mrb[0].mxu0
  %v930 = vadd.f32 0.0, %v929
  %931 = vmatprep.mubr.f32.mxu0 0.0
  %932 = vmatmul.mubr.f32.gmra.mrb[0].mxu0 %v91
  %v933 = vpop.f32.mrb[0].mxu0
  %v934 = vadd.f32 0.0, %v933
  %v935 = vpop.f32.mrb[0].mxu0
  %v936 = vadd.f32 0.0, %v935
  %937 = vmatprep.mubr.f32.mxu0 0.0
  %938 = vmatmul.mubr.f32.gmra.mrb[0].mxu0 %v94
  %v939 = vpop.f32.mrb[0].mxu0
  %v940 = vadd.f32 0.0, %v939
  %v941 = vpop.f32.mrb[0].mxu0
  %v942 = vadd.f32 0.0, %v941
  %943 = vmatprep.mubr.f32.mxu0 0.0
  %944 = vmatmul.mubr.f32.gmra.mrb[0].mxu0 %v97
  %v945 = vpop.f32.mrb[0].mxu0
  %v946 = vadd.f32 0.0, %v945
  %v947 = vpop.f32.mrb[0].mxu0
  %v948 = vadd.f32 0.0, %v947
  %949 = vmatprep.mubr.f32.mxu0 0.0
  %950 = vmatmul.mubr.f32.gmra.mrb[0].mxu0 %v100
  %v951 = vpop.f32.mrb[0].mxu0
  %v952 = vadd.f32 0.0, %v951
  %v953 = vpop.f32.mrb[0].mxu0
  %v954 = vadd.f32 0.0, %v953
  %955 = vmatprep.mubr.f32.mxu0 0.0
  %956 = vmatmul.mubr.f32.gmra.mrb[0].mxu0 %v103
  %v957 = vpop.f32.mrb[0].mxu0
  %v958 = vadd.f32 0.0, %v957
  %v959 = vpop.f32.mrb[0].mxu0
  %v960 = vadd.f32 0.0, %v959
  %961 = vmatprep.mubr.f32.mxu0 0.0
  %962 = vmatmul.mubr.f32.gmra.mrb[0].mxu0 %v106
  %v963 = vpop.f32.mrb[0].mxu0
  %v964 = vadd.f32 0.0, %v963
  %v965 = vpop.f32.mrb[0].mxu0
  %v966 = vadd.f32 0.0, %v965
  %967 = vmatprep.mubr.f32.mxu0 0.0
  %968 = vmatmul.mubr.f32.gmra.mrb[0].mxu0 %v109
  %v969 = vpop.f32.mrb[0].mxu0
  %v970 = vadd.f32 0.0, %v969
  %v971 = vpop.f32.mrb[0].mxu0
  %v972 = vadd.f32 0.0, %v971
  %973 = vmatprep.mubr.f32.mxu0 0.0
  %974 = vmatmul.mubr.f32.gmra.mrb[0].mxu0 %v112
  %v975 = vpop.f32.mrb[0].mxu0
  %v976 = vadd.f32 0.0, %v975
  %v977 = vpop.f32.mrb[0].mxu0
  %v978 = vadd.f32 0.0, %v977
  %979 = vmatprep.mubr.f32.mxu0 0.0
  %980 = vmatmul.mubr.f32.gmra.mrb[0].mxu0 %v115
  %v981 = vpop.f32.mrb[0].mxu0
  %v982 = vadd.f32 0.0, %v981
  %v983 = vpop.f32.mrb[0].mxu0
  %v984 = vadd.f32 0.0, %v983
  %985 = vmatprep.mubr.f32.mxu0 0.0
  %986 = vmatmul.mubr.f32.gmra.mrb[0].mxu0 %v118
  %v987 = vpop.f32.mrb[0].mxu0
  %v988 = vadd.f32 0.0, %v987
  %v989 = vpop.f32.mrb[0].mxu0
  %v990 = vadd.f32 0.0, %v989
  %991 = vmatprep.mubr.f32.mxu0 0.0
  %992 = vmatmul.mubr.f32.gmra.mrb[0].mxu0 %v121
  %v993 = vpop.f32.mrb[0].mxu0
  %v994 = vadd.f32 0.0, %v993
  %v995 = vpop.f32.mrb[0].mxu0
  %v996 = vadd.f32 0.0, %v995
  %997 = vmatprep.mubr.f32.mxu0 0.0
  %998 = vmatmul.mubr.f32.gmra.mrb[0].mxu0 %v124
  %v999 = vpop.f32.mrb[0].mxu0
  %v1000 = vadd.f32 0.0, %v999
  %v1001 = vpop.f32.mrb[0].mxu0
  %v1002 = vadd.f32 0.0, %v1001
  %1003 = vmatprep.mubr.f32.mxu0 0.0
  %1004 = vmatmul.mubr.f32.gmra.mrb[0].mxu0 %v127
  %v1005 = vpop.f32.mrb[0].mxu0
  %v1006 = vadd.f32 0.0, %v1005
  %v1007 = vpop.f32.mrb[0].mxu0
  %v1008 = vadd.f32 0.0, %v1007
  %1009 = vmatprep.mubr.f32.mxu0 0.0
  %1010 = vmatmul.mubr.f32.gmra.mrb[0].mxu0 %v130
  %v1011 = vpop.f32.mrb[0].mxu0
  %v1012 = vadd.f32 0.0, %v1011
  %v1013 = vpop.f32.mrb[0].mxu0
  %v1014 = vadd.f32 0.0, %v1013
  %1015 = vdwg.mxu0
  %v1016 = vmul.f32 %v199, %v199
  %v1017 = vmul.f32 %v205, %v205
  %v1018 = vmul.f32 %v211, %v211
  %v1019 = vmul.f32 %v217, %v217
  %v1020 = vmul.f32 %v223, %v223
  %v1021 = vmul.f32 %v229, %v229
  %v1022 = vmul.f32 %v235, %v235
  %v1023 = vmul.f32 %v241, %v241
  %v1024 = vmul.f32 %v247, %v247
  %v1025 = vmul.f32 %v253, %v253
  %v1026 = vmul.f32 %v259, %v259
  %v1027 = vmul.f32 %v265, %v265
  %v1028 = vmul.f32 %v271, %v271
  %v1029 = vmul.f32 %v277, %v277
  %v1030 = vmul.f32 %v283, %v283
  %v1031 = vmul.f32 %v289, %v289
  %v1032 = vmul.f32 %v295, %v295
  %v1033 = vmul.f32 %v301, %v301
  %v1034 = vmul.f32 %v307, %v307
  %v1035 = vmul.f32 %v313, %v313
  %v1036 = vmul.f32 %v319, %v319
  %v1037 = vmul.f32 %v325, %v325
  %v1038 = vmul.f32 %v331, %v331
  %v1039 = vmul.f32 %v337, %v337
  %v1040 = vmul.f32 %v343, %v343
  %v1041 = vmul.f32 %v349, %v349
  %v1042 = vadd.f32 %v1016, %v1029
  %v1043 = vadd.f32 %v1017, %v1030
  %v1044 = vadd.f32 %v1018, %v1031
  %v1045 = vadd.f32 %v1019, %v1032
  %v1046 = vadd.f32 %v1020, %v1033
  %v1047 = vadd.f32 %v1021, %v1034
  %v1048 = vadd.f32 %v1022, %v1035
  %v1049 = vadd.f32 %v1023, %v1036
  %v1050 = vadd.f32 %v1024, %v1037
  %v1051 = vadd.f32 %v1025, %v1038
  %v1052 = vadd.f32 %v1026, %v1039
  %v1053 = vadd.f32 %v1027, %v1040
  %v1054 = vadd.f32 %v1028, %v1041
  %v1055 = vadd.f32 %v1042, 1e-10
  %v1056 = vadd.f32 %v1043, 1e-10
  %v1057 = vadd.f32 %v1044, 1e-10
  %v1058 = vadd.f32 %v1045, 1e-10
  %v1059 = vadd.f32 %v1046, 1e-10
  %v1060 = vadd.f32 %v1047, 1e-10
  %v1061 = vadd.f32 %v1048, 1e-10
  %v1062 = vadd.f32 %v1049, 1e-10
  %v1063 = vadd.f32 %v1050, 1e-10
  %v1064 = vadd.f32 %v1051, 1e-10
  %v1065 = vadd.f32 %v1052, 1e-10
  %v1066 = vadd.f32 %v1053, 1e-10
  %v1067 = vadd.f32 %v1054, 1e-10
  %v1068 = vlog2.pop %v1055
  %v1069 = vmul.f32 %v1068, 0.6931472
  %v1070 = vlog2.pop %v1056
  %v1071 = vmul.f32 %v1070, 0.6931472
  %v1072 = vlog2.pop %v1057
  %v1073 = vmul.f32 %v1072, 0.6931472
  %v1074 = vlog2.pop %v1058
  %v1075 = vmul.f32 %v1074, 0.6931472
  %v1076 = vlog2.pop %v1059
  %v1077 = vmul.f32 %v1076, 0.6931472
  %v1078 = vlog2.pop %v1060
  %v1079 = vmul.f32 %v1078, 0.6931472
  %v1080 = vlog2.pop %v1061
  %v1081 = vmul.f32 %v1080, 0.6931472
  %v1082 = vlog2.pop %v1062
  %v1083 = vmul.f32 %v1082, 0.6931472
  %v1084 = vlog2.pop %v1063
  %v1085 = vmul.f32 %v1084, 0.6931472
  %v1086 = vlog2.pop %v1064
  %v1087 = vmul.f32 %v1086, 0.6931472
  %v1088 = vlog2.pop %v1065
  %v1089 = vmul.f32 %v1088, 0.6931472
  %v1090 = vlog2.pop %v1066
  %v1091 = vmul.f32 %v1090, 0.6931472
  %v1092 = vlog2.pop %v1067
  %v1093 = vmul.f32 %v1092, 0.6931472
  %1094 = vst [vmem:[%s2] sm:$0xff] %v1069
  %1095 = vst [vmem:[%s2 + $0x8] sm:$0xff] %v1071
  %1096 = vst [vmem:[%s2 + $0x10] sm:$0xff] %v1073
  %1097 = vst [vmem:[%s2 + $0x18] sm:$0xff] %v1075
  %1098 = vst [vmem:[%s2 + $0x20] sm:$0xff] %v1077
  %1099 = vst [vmem:[%s2 + $0x28] sm:$0xff] %v1079
  %1100 = vst [vmem:[%s2 + $0x30] sm:$0xff] %v1081
  %1101 = vst [vmem:[%s2 + $0x38] sm:$0xff] %v1083
  %1102 = vst [vmem:[%s2 + $0x40] sm:$0xff] %v1085
  %1103 = vst [vmem:[%s2 + $0x48] sm:$0xff] %v1087
  %1104 = vst [vmem:[%s2 + $0x50] sm:$0xff] %v1089
  %1105 = vst [vmem:[%s2 + $0x58] sm:$0xff] %v1091
  %1106 = vst [vmem:[%s2 + $0x60] sm:$0xff] %v1093
  %v1107 = vmul.f32 %v201, %v201
  %v1108 = vmul.f32 %v207, %v207
  %v1109 = vmul.f32 %v213, %v213
  %v1110 = vmul.f32 %v219, %v219
  %v1111 = vmul.f32 %v225, %v225
  %v1112 = vmul.f32 %v231, %v231
  %v1113 = vmul.f32 %v237, %v237
  %v1114 = vmul.f32 %v243, %v243
  %v1115 = vmul.f32 %v249, %v249
  %v1116 = vmul.f32 %v255, %v255
  %v1117 = vmul.f32 %v261, %v261
  %v1118 = vmul.f32 %v267, %v267
  %v1119 = vmul.f32 %v273, %v273
  %v1120 = vmul.f32 %v279, %v279
  %v1121 = vmul.f32 %v285, %v285
  %v1122 = vmul.f32 %v291, %v291
  %v1123 = vmul.f32 %v297, %v297
  %v1124 = vmul.f32 %v303, %v303
  %v1125 = vmul.f32 %v309, %v309
  %v1126 = vmul.f32 %v315, %v315
  %v1127 = vmul.f32 %v321, %v321
  %v1128 = vmul.f32 %v327, %v327
  %v1129 = vmul.f32 %v333, %v333
  %v1130 = vmul.f32 %v339, %v339
  %v1131 = vmul.f32 %v345, %v345
  %v1132 = vmul.f32 %v351, %v351
  %v1133 = vadd.f32 %v1107, %v1120
  %v1134 = vadd.f32 %v1108, %v1121
  %v1135 = vadd.f32 %v1109, %v1122
  %v1136 = vadd.f32 %v1110, %v1123
  %v1137 = vadd.f32 %v1111, %v1124
  %v1138 = vadd.f32 %v1112, %v1125
  %v1139 = vadd.f32 %v1113, %v1126
  %v1140 = vadd.f32 %v1114, %v1127
  %v1141 = vadd.f32 %v1115, %v1128
  %v1142 = vadd.f32 %v1116, %v1129
  %v1143 = vadd.f32 %v1117, %v1130
  %v1144 = vadd.f32 %v1118, %v1131
  %v1145 = vadd.f32 %v1119, %v1132
  %v1146 = vadd.f32 %v1133, 1e-10
  %v1147 = vadd.f32 %v1134, 1e-10
  %v1148 = vadd.f32 %v1135, 1e-10
  %v1149 = vadd.f32 %v1136, 1e-10
  %v1150 = vadd.f32 %v1137, 1e-10
  %v1151 = vadd.f32 %v1138, 1e-10
  %v1152 = vadd.f32 %v1139, 1e-10
  %v1153 = vadd.f32 %v1140, 1e-10
  %v1154 = vadd.f32 %v1141, 1e-10
  %v1155 = vadd.f32 %v1142, 1e-10
  %v1156 = vadd.f32 %v1143, 1e-10
  %v1157 = vadd.f32 %v1144, 1e-10
  %v1158 = vadd.f32 %v1145, 1e-10
  %v1159 = vlog2.pop %v1146
  %v1160 = vmul.f32 %v1159, 0.6931472
  %v1161 = vlog2.pop %v1147
  %v1162 = vmul.f32 %v1161, 0.6931472
  %v1163 = vlog2.pop %v1148
  %v1164 = vmul.f32 %v1163, 0.6931472
  %v1165 = vlog2.pop %v1149
  %v1166 = vmul.f32 %v1165, 0.6931472
  %v1167 = vlog2.pop %v1150
  %v1168 = vmul.f32 %v1167, 0.6931472
  %v1169 = vlog2.pop %v1151
  %v1170 = vmul.f32 %v1169, 0.6931472
  %v1171 = vlog2.pop %v1152
  %v1172 = vmul.f32 %v1171, 0.6931472
  %v1173 = vlog2.pop %v1153
  %v1174 = vmul.f32 %v1173, 0.6931472
  %v1175 = vlog2.pop %v1154
  %v1176 = vmul.f32 %v1175, 0.6931472
  %v1177 = vlog2.pop %v1155
  %v1178 = vmul.f32 %v1177, 0.6931472
  %v1179 = vlog2.pop %v1156
  %v1180 = vmul.f32 %v1179, 0.6931472
  %v1181 = vlog2.pop %v1157
  %v1182 = vmul.f32 %v1181, 0.6931472
  %v1183 = vlog2.pop %v1158
  %v1184 = vmul.f32 %v1183, 0.6931472
  %s1185 = scalar_lea.vmem %s2, 104
  %1186 = vst [vmem:[%s1185] sm:$0xff] %v1160
  %1187 = vst [vmem:[%s1185 + $0x8] sm:$0xff] %v1162
  %1188 = vst [vmem:[%s1185 + $0x10] sm:$0xff] %v1164
  %1189 = vst [vmem:[%s1185 + $0x18] sm:$0xff] %v1166
  %1190 = vst [vmem:[%s1185 + $0x20] sm:$0xff] %v1168
  %1191 = vst [vmem:[%s1185 + $0x28] sm:$0xff] %v1170
  %1192 = vst [vmem:[%s1185 + $0x30] sm:$0xff] %v1172
  %1193 = vst [vmem:[%s1185 + $0x38] sm:$0xff] %v1174
  %1194 = vst [vmem:[%s1185 + $0x40] sm:$0xff] %v1176
  %1195 = vst [vmem:[%s1185 + $0x48] sm:$0xff] %v1178
  %1196 = vst [vmem:[%s1185 + $0x50] sm:$0xff] %v1180
  %1197 = vst [vmem:[%s1185 + $0x58] sm:$0xff] %v1182
  %1198 = vst [vmem:[%s1185 + $0x60] sm:$0xff] %v1184
  %v1199 = vmul.f32 %v420, %v420
  %v1200 = vmul.f32 %v426, %v426
  %v1201 = vmul.f32 %v432, %v432
  %v1202 = vmul.f32 %v438, %v438
  %v1203 = vmul.f32 %v444, %v444
  %v1204 = vmul.f32 %v450, %v450
  %v1205 = vmul.f32 %v456, %v456
  %v1206 = vmul.f32 %v462, %v462
  %v1207 = vmul.f32 %v468, %v468
  %v1208 = vmul.f32 %v474, %v474
  %v1209 = vmul.f32 %v480, %v480
  %v1210 = vmul.f32 %v486, %v486
  %v1211 = vmul.f32 %v492, %v492
  %v1212 = vmul.f32 %v498, %v498
  %v1213 = vmul.f32 %v504, %v504
  %v1214 = vmul.f32 %v510, %v510
  %v1215 = vmul.f32 %v516, %v516
  %v1216 = vmul.f32 %v522, %v522
  %v1217 = vmul.f32 %v528, %v528
  %v1218 = vmul.f32 %v534, %v534
  %v1219 = vmul.f32 %v540, %v540
  %v1220 = vmul.f32 %v546, %v546
  %v1221 = vmul.f32 %v552, %v552
  %v1222 = vmul.f32 %v558, %v558
  %v1223 = vmul.f32 %v564, %v564
  %v1224 = vmul.f32 %v570, %v570
  %v1225 = vadd.f32 %v1199, %v1212
  %v1226 = vadd.f32 %v1200, %v1213
  %v1227 = vadd.f32 %v1201, %v1214
  %v1228 = vadd.f32 %v1202, %v1215
  %v1229 = vadd.f32 %v1203, %v1216
  %v1230 = vadd.f32 %v1204, %v1217
  %v1231 = vadd.f32 %v1205, %v1218
  %v1232 = vadd.f32 %v1206, %v1219
  %v1233 = vadd.f32 %v1207, %v1220
  %v1234 = vadd.f32 %v1208, %v1221
  %v1235 = vadd.f32 %v1209, %v1222
  %v1236 = vadd.f32 %v1210, %v1223
  %v1237 = vadd.f32 %v1211, %v1224
  %v1238 = vadd.f32 %v1225, 1e-10
  %v1239 = vadd.f32 %v1226, 1e-10
  %v1240 = vadd.f32 %v1227, 1e-10
  %v1241 = vadd.f32 %v1228, 1e-10
  %v1242 = vadd.f32 %v1229, 1e-10
  %v1243 = vadd.f32 %v1230, 1e-10
  %v1244 = vadd.f32 %v1231, 1e-10
  %v1245 = vadd.f32 %v1232, 1e-10
  %v1246 = vadd.f32 %v1233, 1e-10
  %v1247 = vadd.f32 %v1234, 1e-10
  %v1248 = vadd.f32 %v1235, 1e-10
  %v1249 = vadd.f32 %v1236, 1e-10
  %v1250 = vadd.f32 %v1237, 1e-10
  %v1251 = vlog2.pop %v1238
  %v1252 = vmul.f32 %v1251, 0.6931472
  %v1253 = vlog2.pop %v1239
  %v1254 = vmul.f32 %v1253, 0.6931472
  %v1255 = vlog2.pop %v1240
  %v1256 = vmul.f32 %v1255, 0.6931472
  %v1257 = vlog2.pop %v1241
  %v1258 = vmul.f32 %v1257, 0.6931472
  %v1259 = vlog2.pop %v1242
  %v1260 = vmul.f32 %v1259, 0.6931472
  %v1261 = vlog2.pop %v1243
  %v1262 = vmul.f32 %v1261, 0.6931472
  %v1263 = vlog2.pop %v1244
  %v1264 = vmul.f32 %v1263, 0.6931472
  %v1265 = vlog2.pop %v1245
  %v1266 = vmul.f32 %v1265, 0.6931472
  %v1267 = vlog2.pop %v1246
  %v1268 = vmul.f32 %v1267, 0.6931472
  %v1269 = vlog2.pop %v1247
  %v1270 = vmul.f32 %v1269, 0.6931472
  %v1271 = vlog2.pop %v1248
  %v1272 = vmul.f32 %v1271, 0.6931472
  %v1273 = vlog2.pop %v1249
  %v1274 = vmul.f32 %v1273, 0.6931472
  %v1275 = vlog2.pop %v1250
  %v1276 = vmul.f32 %v1275, 0.6931472
  %s1277 = scalar_lea.vmem %s2, 208
  %1278 = vst [vmem:[%s1277] sm:$0xff] %v1252
  %1279 = vst [vmem:[%s1277 + $0x8] sm:$0xff] %v1254
  %1280 = vst [vmem:[%s1277 + $0x10] sm:$0xff] %v1256
  %1281 = vst [vmem:[%s1277 + $0x18] sm:$0xff] %v1258
  %1282 = vst [vmem:[%s1277 + $0x20] sm:$0xff] %v1260
  %1283 = vst [vmem:[%s1277 + $0x28] sm:$0xff] %v1262
  %1284 = vst [vmem:[%s1277 + $0x30] sm:$0xff] %v1264
  %1285 = vst [vmem:[%s1277 + $0x38] sm:$0xff] %v1266
  %1286 = vst [vmem:[%s1277 + $0x40] sm:$0xff] %v1268
  %1287 = vst [vmem:[%s1277 + $0x48] sm:$0xff] %v1270
  %1288 = vst [vmem:[%s1277 + $0x50] sm:$0xff] %v1272
  %1289 = vst [vmem:[%s1277 + $0x58] sm:$0xff] %v1274
  %1290 = vst [vmem:[%s1277 + $0x60] sm:$0xff] %v1276
  %v1291 = vmul.f32 %v422, %v422
  %v1292 = vmul.f32 %v428, %v428
  %v1293 = vmul.f32 %v434, %v434
  %v1294 = vmul.f32 %v440, %v440
  %v1295 = vmul.f32 %v446, %v446
  %v1296 = vmul.f32 %v452, %v452
  %v1297 = vmul.f32 %v458, %v458
  %v1298 = vmul.f32 %v464, %v464
  %v1299 = vmul.f32 %v470, %v470
  %v1300 = vmul.f32 %v476, %v476
  %v1301 = vmul.f32 %v482, %v482
  %v1302 = vmul.f32 %v488, %v488
  %v1303 = vmul.f32 %v494, %v494
  %v1304 = vmul.f32 %v500, %v500
  %v1305 = vmul.f32 %v506, %v506
  %v1306 = vmul.f32 %v512, %v512
  %v1307 = vmul.f32 %v518, %v518
  %v1308 = vmul.f32 %v524, %v524
  %v1309 = vmul.f32 %v530, %v530
  %v1310 = vmul.f32 %v536, %v536
  %v1311 = vmul.f32 %v542, %v542
  %v1312 = vmul.f32 %v548, %v548
  %v1313 = vmul.f32 %v554, %v554
  %v1314 = vmul.f32 %v560, %v560
  %v1315 = vmul.f32 %v566, %v566
  %v1316 = vmul.f32 %v572, %v572
  %v1317 = vadd.f32 %v1291, %v1304
  %v1318 = vadd.f32 %v1292, %v1305
  %v1319 = vadd.f32 %v1293, %v1306
  %v1320 = vadd.f32 %v1294, %v1307
  %v1321 = vadd.f32 %v1295, %v1308
  %v1322 = vadd.f32 %v1296, %v1309
  %v1323 = vadd.f32 %v1297, %v1310
  %v1324 = vadd.f32 %v1298, %v1311
  %v1325 = vadd.f32 %v1299, %v1312
  %v1326 = vadd.f32 %v1300, %v1313
  %v1327 = vadd.f32 %v1301, %v1314
  %v1328 = vadd.f32 %v1302, %v1315
  %v1329 = vadd.f32 %v1303, %v1316
  %v1330 = vadd.f32 %v1317, 1e-10
  %v1331 = vadd.f32 %v1318, 1e-10
  %v1332 = vadd.f32 %v1319, 1e-10
  %v1333 = vadd.f32 %v1320, 1e-10
  %v1334 = vadd.f32 %v1321, 1e-10
  %v1335 = vadd.f32 %v1322, 1e-10
  %v1336 = vadd.f32 %v1323, 1e-10
  %v1337 = vadd.f32 %v1324, 1e-10
  %v1338 = vadd.f32 %v1325, 1e-10
  %v1339 = vadd.f32 %v1326, 1e-10
  %v1340 = vadd.f32 %v1327, 1e-10
  %v1341 = vadd.f32 %v1328, 1e-10
  %v1342 = vadd.f32 %v1329, 1e-10
  %v1343 = vlog2.pop %v1330
  %v1344 = vmul.f32 %v1343, 0.6931472
  %v1345 = vlog2.pop %v1331
  %v1346 = vmul.f32 %v1345, 0.6931472
  %v1347 = vlog2.pop %v1332
  %v1348 = vmul.f32 %v1347, 0.6931472
  %v1349 = vlog2.pop %v1333
  %v1350 = vmul.f32 %v1349, 0.6931472
  %v1351 = vlog2.pop %v1334
  %v1352 = vmul.f32 %v1351, 0.6931472
  %v1353 = vlog2.pop %v1335
  %v1354 = vmul.f32 %v1353, 0.6931472
  %v1355 = vlog2.pop %v1336
  %v1356 = vmul.f32 %v1355, 0.6931472
  %v1357 = vlog2.pop %v1337
  %v1358 = vmul.f32 %v1357, 0.6931472
  %v1359 = vlog2.pop %v1338
  %v1360 = vmul.f32 %v1359, 0.6931472
  %v1361 = vlog2.pop %v1339
  %v1362 = vmul.f32 %v1361, 0.6931472
  %v1363 = vlog2.pop %v1340
  %v1364 = vmul.f32 %v1363, 0.6931472
  %v1365 = vlog2.pop %v1341
  %v1366 = vmul.f32 %v1365, 0.6931472
  %v1367 = vlog2.pop %v1342
  %v1368 = vmul.f32 %v1367, 0.6931472
  %s1369 = scalar_lea.vmem %s2, 312
  %1370 = vst [vmem:[%s1369] sm:$0xff] %v1344
  %1371 = vst [vmem:[%s1369 + $0x8] sm:$0xff] %v1346
  %1372 = vst [vmem:[%s1369 + $0x10] sm:$0xff] %v1348
  %1373 = vst [vmem:[%s1369 + $0x18] sm:$0xff] %v1350
  %1374 = vst [vmem:[%s1369 + $0x20] sm:$0xff] %v1352
  %1375 = vst [vmem:[%s1369 + $0x28] sm:$0xff] %v1354
  %1376 = vst [vmem:[%s1369 + $0x30] sm:$0xff] %v1356
  %1377 = vst [vmem:[%s1369 + $0x38] sm:$0xff] %v1358
  %1378 = vst [vmem:[%s1369 + $0x40] sm:$0xff] %v1360
  %1379 = vst [vmem:[%s1369 + $0x48] sm:$0xff] %v1362
  %1380 = vst [vmem:[%s1369 + $0x50] sm:$0xff] %v1364
  %1381 = vst [vmem:[%s1369 + $0x58] sm:$0xff] %v1366
  %1382 = vst [vmem:[%s1369 + $0x60] sm:$0xff] %v1368
  %v1383 = vmul.f32 %v641, %v641
  %v1384 = vmul.f32 %v647, %v647
  %v1385 = vmul.f32 %v653, %v653
  %v1386 = vmul.f32 %v659, %v659
  %v1387 = vmul.f32 %v665, %v665
  %v1388 = vmul.f32 %v671, %v671
  %v1389 = vmul.f32 %v677, %v677
  %v1390 = vmul.f32 %v683, %v683
  %v1391 = vmul.f32 %v689, %v689
  %v1392 = vmul.f32 %v695, %v695
  %v1393 = vmul.f32 %v701, %v701
  %v1394 = vmul.f32 %v707, %v707
  %v1395 = vmul.f32 %v713, %v713
  %v1396 = vmul.f32 %v719, %v719
  %v1397 = vmul.f32 %v725, %v725
  %v1398 = vmul.f32 %v731, %v731
  %v1399 = vmul.f32 %v737, %v737
  %v1400 = vmul.f32 %v743, %v743
  %v1401 = vmul.f32 %v749, %v749
  %v1402 = vmul.f32 %v755, %v755
  %v1403 = vmul.f32 %v761, %v761
  %v1404 = vmul.f32 %v767, %v767
  %v1405 = vmul.f32 %v773, %v773
  %v1406 = vmul.f32 %v779, %v779
  %v1407 = vmul.f32 %v785, %v785
  %v1408 = vmul.f32 %v791, %v791
  %v1409 = vadd.f32 %v1383, %v1396
  %v1410 = vadd.f32 %v1384, %v1397
  %v1411 = vadd.f32 %v1385, %v1398
  %v1412 = vadd.f32 %v1386, %v1399
  %v1413 = vadd.f32 %v1387, %v1400
  %v1414 = vadd.f32 %v1388, %v1401
  %v1415 = vadd.f32 %v1389, %v1402
  %v1416 = vadd.f32 %v1390, %v1403
  %v1417 = vadd.f32 %v1391, %v1404
  %v1418 = vadd.f32 %v1392, %v1405
  %v1419 = vadd.f32 %v1393, %v1406
  %v1420 = vadd.f32 %v1394, %v1407
  %v1421 = vadd.f32 %v1395, %v1408
  %v1422 = vadd.f32 %v1409, 1e-10
  %v1423 = vadd.f32 %v1410, 1e-10
  %v1424 = vadd.f32 %v1411, 1e-10
  %v1425 = vadd.f32 %v1412, 1e-10
  %v1426 = vadd.f32 %v1413, 1e-10
  %v1427 = vadd.f32 %v1414, 1e-10
  %v1428 = vadd.f32 %v1415, 1e-10
  %v1429 = vadd.f32 %v1416, 1e-10
  %v1430 = vadd.f32 %v1417, 1e-10
  %v1431 = vadd.f32 %v1418, 1e-10
  %v1432 = vadd.f32 %v1419, 1e-10
  %v1433 = vadd.f32 %v1420, 1e-10
  %v1434 = vadd.f32 %v1421, 1e-10
  %v1435 = vlog2.pop %v1422
  %v1436 = vmul.f32 %v1435, 0.6931472
  %v1437 = vlog2.pop %v1423
  %v1438 = vmul.f32 %v1437, 0.6931472
  %v1439 = vlog2.pop %v1424
  %v1440 = vmul.f32 %v1439, 0.6931472
  %v1441 = vlog2.pop %v1425
  %v1442 = vmul.f32 %v1441, 0.6931472
  %v1443 = vlog2.pop %v1426
  %v1444 = vmul.f32 %v1443, 0.6931472
  %v1445 = vlog2.pop %v1427
  %v1446 = vmul.f32 %v1445, 0.6931472
  %v1447 = vlog2.pop %v1428
  %v1448 = vmul.f32 %v1447, 0.6931472
  %v1449 = vlog2.pop %v1429
  %v1450 = vmul.f32 %v1449, 0.6931472
  %v1451 = vlog2.pop %v1430
  %v1452 = vmul.f32 %v1451, 0.6931472
  %v1453 = vlog2.pop %v1431
  %v1454 = vmul.f32 %v1453, 0.6931472
  %v1455 = vlog2.pop %v1432
  %v1456 = vmul.f32 %v1455, 0.6931472
  %v1457 = vlog2.pop %v1433
  %v1458 = vmul.f32 %v1457, 0.6931472
  %v1459 = vlog2.pop %v1434
  %v1460 = vmul.f32 %v1459, 0.6931472
  %s1461 = scalar_lea.vmem %s2, 416
  %1462 = vst [vmem:[%s1461] sm:$0xff] %v1436
  %1463 = vst [vmem:[%s1461 + $0x8] sm:$0xff] %v1438
  %1464 = vst [vmem:[%s1461 + $0x10] sm:$0xff] %v1440
  %1465 = vst [vmem:[%s1461 + $0x18] sm:$0xff] %v1442
  %1466 = vst [vmem:[%s1461 + $0x20] sm:$0xff] %v1444
  %1467 = vst [vmem:[%s1461 + $0x28] sm:$0xff] %v1446
  %1468 = vst [vmem:[%s1461 + $0x30] sm:$0xff] %v1448
  %1469 = vst [vmem:[%s1461 + $0x38] sm:$0xff] %v1450
  %1470 = vst [vmem:[%s1461 + $0x40] sm:$0xff] %v1452
  %1471 = vst [vmem:[%s1461 + $0x48] sm:$0xff] %v1454
  %1472 = vst [vmem:[%s1461 + $0x50] sm:$0xff] %v1456
  %1473 = vst [vmem:[%s1461 + $0x58] sm:$0xff] %v1458
  %1474 = vst [vmem:[%s1461 + $0x60] sm:$0xff] %v1460
  %v1475 = vmul.f32 %v643, %v643
  %v1476 = vmul.f32 %v649, %v649
  %v1477 = vmul.f32 %v655, %v655
  %v1478 = vmul.f32 %v661, %v661
  %v1479 = vmul.f32 %v667, %v667
  %v1480 = vmul.f32 %v673, %v673
  %v1481 = vmul.f32 %v679, %v679
  %v1482 = vmul.f32 %v685, %v685
  %v1483 = vmul.f32 %v691, %v691
  %v1484 = vmul.f32 %v697, %v697
  %v1485 = vmul.f32 %v703, %v703
  %v1486 = vmul.f32 %v709, %v709
  %v1487 = vmul.f32 %v715, %v715
  %v1488 = vmul.f32 %v721, %v721
  %v1489 = vmul.f32 %v727, %v727
  %v1490 = vmul.f32 %v733, %v733
  %v1491 = vmul.f32 %v739, %v739
  %v1492 = vmul.f32 %v745, %v745
  %v1493 = vmul.f32 %v751, %v751
  %v1494 = vmul.f32 %v757, %v757
  %v1495 = vmul.f32 %v763, %v763
  %v1496 = vmul.f32 %v769, %v769
  %v1497 = vmul.f32 %v775, %v775
  %v1498 = vmul.f32 %v781, %v781
  %v1499 = vmul.f32 %v787, %v787
  %v1500 = vmul.f32 %v793, %v793
  %v1501 = vadd.f32 %v1475, %v1488
  %v1502 = vadd.f32 %v1476, %v1489
  %v1503 = vadd.f32 %v1477, %v1490
  %v1504 = vadd.f32 %v1478, %v1491
  %v1505 = vadd.f32 %v1479, %v1492
  %v1506 = vadd.f32 %v1480, %v1493
  %v1507 = vadd.f32 %v1481, %v1494
  %v1508 = vadd.f32 %v1482, %v1495
  %v1509 = vadd.f32 %v1483, %v1496
  %v1510 = vadd.f32 %v1484, %v1497
  %v1511 = vadd.f32 %v1485, %v1498
  %v1512 = vadd.f32 %v1486, %v1499
  %v1513 = vadd.f32 %v1487, %v1500
  %v1514 = vadd.f32 %v1501, 1e-10
  %v1515 = vadd.f32 %v1502, 1e-10
  %v1516 = vadd.f32 %v1503, 1e-10
  %v1517 = vadd.f32 %v1504, 1e-10
  %v1518 = vadd.f32 %v1505, 1e-10
  %v1519 = vadd.f32 %v1506, 1e-10
  %v1520 = vadd.f32 %v1507, 1e-10
  %v1521 = vadd.f32 %v1508, 1e-10
  %v1522 = vadd.f32 %v1509, 1e-10
  %v1523 = vadd.f32 %v1510, 1e-10
  %v1524 = vadd.f32 %v1511, 1e-10
  %v1525 = vadd.f32 %v1512, 1e-10
  %v1526 = vadd.f32 %v1513, 1e-10
  %v1527 = vlog2.pop %v1514
  %v1528 = vmul.f32 %v1527, 0.6931472
  %v1529 = vlog2.pop %v1515
  %v1530 = vmul.f32 %v1529, 0.6931472
  %v1531 = vlog2.pop %v1516
  %v1532 = vmul.f32 %v1531, 0.6931472
  %v1533 = vlog2.pop %v1517
  %v1534 = vmul.f32 %v1533, 0.6931472
  %v1535 = vlog2.pop %v1518
  %v1536 = vmul.f32 %v1535, 0.6931472
  %v1537 = vlog2.pop %v1519
  %v1538 = vmul.f32 %v1537, 0.6931472
  %v1539 = vlog2.pop %v1520
  %v1540 = vmul.f32 %v1539, 0.6931472
  %v1541 = vlog2.pop %v1521
  %v1542 = vmul.f32 %v1541, 0.6931472
  %v1543 = vlog2.pop %v1522
  %v1544 = vmul.f32 %v1543, 0.6931472
  %v1545 = vlog2.pop %v1523
  %v1546 = vmul.f32 %v1545, 0.6931472
  %v1547 = vlog2.pop %v1524
  %v1548 = vmul.f32 %v1547, 0.6931472
  %v1549 = vlog2.pop %v1525
  %v1550 = vmul.f32 %v1549, 0.6931472
  %v1551 = vlog2.pop %v1526
  %v1552 = vmul.f32 %v1551, 0.6931472
  %s1553 = scalar_lea.vmem %s2, 520
  %1554 = vst [vmem:[%s1553] sm:$0xff] %v1528
  %1555 = vst [vmem:[%s1553 + $0x8] sm:$0xff] %v1530
  %1556 = vst [vmem:[%s1553 + $0x10] sm:$0xff] %v1532
  %1557 = vst [vmem:[%s1553 + $0x18] sm:$0xff] %v1534
  %1558 = vst [vmem:[%s1553 + $0x20] sm:$0xff] %v1536
  %1559 = vst [vmem:[%s1553 + $0x28] sm:$0xff] %v1538
  %1560 = vst [vmem:[%s1553 + $0x30] sm:$0xff] %v1540
  %1561 = vst [vmem:[%s1553 + $0x38] sm:$0xff] %v1542
  %1562 = vst [vmem:[%s1553 + $0x40] sm:$0xff] %v1544
  %1563 = vst [vmem:[%s1553 + $0x48] sm:$0xff] %v1546
  %1564 = vst [vmem:[%s1553 + $0x50] sm:$0xff] %v1548
  %1565 = vst [vmem:[%s1553 + $0x58] sm:$0xff] %v1550
  %1566 = vst [vmem:[%s1553 + $0x60] sm:$0xff] %v1552
  %v1567 = vmul.f32 %v862, %v862
  %v1568 = vmul.f32 %v868, %v868
  %v1569 = vmul.f32 %v874, %v874
  %v1570 = vmul.f32 %v880, %v880
  %v1571 = vmul.f32 %v886, %v886
  %v1572 = vmul.f32 %v892, %v892
  %v1573 = vmul.f32 %v898, %v898
  %v1574 = vmul.f32 %v904, %v904
  %v1575 = vmul.f32 %v910, %v910
  %v1576 = vmul.f32 %v916, %v916
  %v1577 = vmul.f32 %v922, %v922
  %v1578 = vmul.f32 %v928, %v928
  %v1579 = vmul.f32 %v934, %v934
  %v1580 = vmul.f32 %v940, %v940
  %v1581 = vmul.f32 %v946, %v946
  %v1582 = vmul.f32 %v952, %v952
  %v1583 = vmul.f32 %v958, %v958
  %v1584 = vmul.f32 %v964, %v964
  %v1585 = vmul.f32 %v970, %v970
  %v1586 = vmul.f32 %v976, %v976
  %v1587 = vmul.f32 %v982, %v982
  %v1588 = vmul.f32 %v988, %v988
  %v1589 = vmul.f32 %v994, %v994
  %v1590 = vmul.f32 %v1000, %v1000
  %v1591 = vmul.f32 %v1006, %v1006
  %v1592 = vmul.f32 %v1012, %v1012
  %v1593 = vadd.f32 %v1567, %v1580
  %v1594 = vadd.f32 %v1568, %v1581
  %v1595 = vadd.f32 %v1569, %v1582
  %v1596 = vadd.f32 %v1570, %v1583
  %v1597 = vadd.f32 %v1571, %v1584
  %v1598 = vadd.f32 %v1572, %v1585
  %v1599 = vadd.f32 %v1573, %v1586
  %v1600 = vadd.f32 %v1574, %v1587
  %v1601 = vadd.f32 %v1575, %v1588
  %v1602 = vadd.f32 %v1576, %v1589
  %v1603 = vadd.f32 %v1577, %v1590
  %v1604 = vadd.f32 %v1578, %v1591
  %v1605 = vadd.f32 %v1579, %v1592
  %v1606 = vadd.f32 %v1593, 1e-10
  %v1607 = vadd.f32 %v1594, 1e-10
  %v1608 = vadd.f32 %v1595, 1e-10
  %v1609 = vadd.f32 %v1596, 1e-10
  %v1610 = vadd.f32 %v1597, 1e-10
  %v1611 = vadd.f32 %v1598, 1e-10
  %v1612 = vadd.f32 %v1599, 1e-10
  %v1613 = vadd.f32 %v1600, 1e-10
  %v1614 = vadd.f32 %v1601, 1e-10
  %v1615 = vadd.f32 %v1602, 1e-10
  %v1616 = vadd.f32 %v1603, 1e-10
  %v1617 = vadd.f32 %v1604, 1e-10
  %v1618 = vadd.f32 %v1605, 1e-10
  %v1619 = vlog2.pop %v1606
  %v1620 = vmul.f32 %v1619, 0.6931472
  %v1621 = vlog2.pop %v1607
  %v1622 = vmul.f32 %v1621, 0.6931472
  %v1623 = vlog2.pop %v1608
  %v1624 = vmul.f32 %v1623, 0.6931472
  %v1625 = vlog2.pop %v1609
  %v1626 = vmul.f32 %v1625, 0.6931472
  %v1627 = vlog2.pop %v1610
  %v1628 = vmul.f32 %v1627, 0.6931472
  %v1629 = vlog2.pop %v1611
  %v1630 = vmul.f32 %v1629, 0.6931472
  %v1631 = vlog2.pop %v1612
  %v1632 = vmul.f32 %v1631, 0.6931472
  %v1633 = vlog2.pop %v1613
  %v1634 = vmul.f32 %v1633, 0.6931472
  %v1635 = vlog2.pop %v1614
  %v1636 = vmul.f32 %v1635, 0.6931472
  %v1637 = vlog2.pop %v1615
  %v1638 = vmul.f32 %v1637, 0.6931472
  %v1639 = vlog2.pop %v1616
  %v1640 = vmul.f32 %v1639, 0.6931472
  %v1641 = vlog2.pop %v1617
  %v1642 = vmul.f32 %v1641, 0.6931472
  %v1643 = vlog2.pop %v1618
  %v1644 = vmul.f32 %v1643, 0.6931472
  %s1645 = scalar_lea.vmem %s2, 624
  %1646 = vst [vmem:[%s1645] sm:$0xff] %v1620
  %1647 = vst [vmem:[%s1645 + $0x8] sm:$0xff] %v1622
  %1648 = vst [vmem:[%s1645 + $0x10] sm:$0xff] %v1624
  %1649 = vst [vmem:[%s1645 + $0x18] sm:$0xff] %v1626
  %1650 = vst [vmem:[%s1645 + $0x20] sm:$0xff] %v1628
  %1651 = vst [vmem:[%s1645 + $0x28] sm:$0xff] %v1630
  %1652 = vst [vmem:[%s1645 + $0x30] sm:$0xff] %v1632
  %1653 = vst [vmem:[%s1645 + $0x38] sm:$0xff] %v1634
  %1654 = vst [vmem:[%s1645 + $0x40] sm:$0xff] %v1636
  %1655 = vst [vmem:[%s1645 + $0x48] sm:$0xff] %v1638
  %1656 = vst [vmem:[%s1645 + $0x50] sm:$0xff] %v1640
  %1657 = vst [vmem:[%s1645 + $0x58] sm:$0xff] %v1642
  %1658 = vst [vmem:[%s1645 + $0x60] sm:$0xff] %v1644
  %v1659 = vmul.f32 %v864, %v864
  %v1660 = vmul.f32 %v870, %v870
  %v1661 = vmul.f32 %v876, %v876
  %v1662 = vmul.f32 %v882, %v882
  %v1663 = vmul.f32 %v888, %v888
  %v1664 = vmul.f32 %v894, %v894
  %v1665 = vmul.f32 %v900, %v900
  %v1666 = vmul.f32 %v906, %v906
  %v1667 = vmul.f32 %v912, %v912
  %v1668 = vmul.f32 %v918, %v918
  %v1669 = vmul.f32 %v924, %v924
  %v1670 = vmul.f32 %v930, %v930
  %v1671 = vmul.f32 %v936, %v936
  %v1672 = vmul.f32 %v942, %v942
  %v1673 = vmul.f32 %v948, %v948
  %v1674 = vmul.f32 %v954, %v954
  %v1675 = vmul.f32 %v960, %v960
  %v1676 = vmul.f32 %v966, %v966
  %v1677 = vmul.f32 %v972, %v972
  %v1678 = vmul.f32 %v978, %v978
  %v1679 = vmul.f32 %v984, %v984
  %v1680 = vmul.f32 %v990, %v990
  %v1681 = vmul.f32 %v996, %v996
  %v1682 = vmul.f32 %v1002, %v1002
  %v1683 = vmul.f32 %v1008, %v1008
  %v1684 = vmul.f32 %v1014, %v1014
  %v1685 = vadd.f32 %v1659, %v1672
  %v1686 = vadd.f32 %v1660, %v1673
  %v1687 = vadd.f32 %v1661, %v1674
  %v1688 = vadd.f32 %v1662, %v1675
  %v1689 = vadd.f32 %v1663, %v1676
  %v1690 = vadd.f32 %v1664, %v1677
  %v1691 = vadd.f32 %v1665, %v1678
  %v1692 = vadd.f32 %v1666, %v1679
  %v1693 = vadd.f32 %v1667, %v1680
  %v1694 = vadd.f32 %v1668, %v1681
  %v1695 = vadd.f32 %v1669, %v1682
  %v1696 = vadd.f32 %v1670, %v1683
  %v1697 = vadd.f32 %v1671, %v1684
  %v1698 = vadd.f32 %v1685, 1e-10
  %v1699 = vadd.f32 %v1686, 1e-10
  %v1700 = vadd.f32 %v1687, 1e-10
  %v1701 = vadd.f32 %v1688, 1e-10
  %v1702 = vadd.f32 %v1689, 1e-10
  %v1703 = vadd.f32 %v1690, 1e-10
  %v1704 = vadd.f32 %v1691, 1e-10
  %v1705 = vadd.f32 %v1692, 1e-10
  %v1706 = vadd.f32 %v1693, 1e-10
  %v1707 = vadd.f32 %v1694, 1e-10
  %v1708 = vadd.f32 %v1695, 1e-10
  %v1709 = vadd.f32 %v1696, 1e-10
  %v1710 = vadd.f32 %v1697, 1e-10
  %v1711 = vlog2.pop %v1698
  %v1712 = vmul.f32 %v1711, 0.6931472
  %v1713 = vlog2.pop %v1699
  %v1714 = vmul.f32 %v1713, 0.6931472
  %v1715 = vlog2.pop %v1700
  %v1716 = vmul.f32 %v1715, 0.6931472
  %v1717 = vlog2.pop %v1701
  %v1718 = vmul.f32 %v1717, 0.6931472
  %v1719 = vlog2.pop %v1702
  %v1720 = vmul.f32 %v1719, 0.6931472
  %v1721 = vlog2.pop %v1703
  %v1722 = vmul.f32 %v1721, 0.6931472
  %v1723 = vlog2.pop %v1704
  %v1724 = vmul.f32 %v1723, 0.6931472
  %v1725 = vlog2.pop %v1705
  %v1726 = vmul.f32 %v1725, 0.6931472
  %v1727 = vlog2.pop %v1706
  %v1728 = vmul.f32 %v1727, 0.6931472
  %v1729 = vlog2.pop %v1707
  %v1730 = vmul.f32 %v1729, 0.6931472
  %v1731 = vlog2.pop %v1708
  %v1732 = vmul.f32 %v1731, 0.6931472
  %v1733 = vlog2.pop %v1709
  %v1734 = vmul.f32 %v1733, 0.6931472
  %v1735 = vlog2.pop %v1710
  %v1736 = vmul.f32 %v1735, 0.6931472
  %s1737 = scalar_lea.vmem %s2, 728
  %1738 = vst [vmem:[%s1737] sm:$0xff] %v1712
  %1739 = vst [vmem:[%s1737 + $0x8] sm:$0xff] %v1714
  %1740 = vst [vmem:[%s1737 + $0x10] sm:$0xff] %v1716
  %1741 = vst [vmem:[%s1737 + $0x18] sm:$0xff] %v1718
  %1742 = vst [vmem:[%s1737 + $0x20] sm:$0xff] %v1720
  %1743 = vst [vmem:[%s1737 + $0x28] sm:$0xff] %v1722
  %1744 = vst [vmem:[%s1737 + $0x30] sm:$0xff] %v1724
  %1745 = vst [vmem:[%s1737 + $0x38] sm:$0xff] %v1726
  %1746 = vst [vmem:[%s1737 + $0x40] sm:$0xff] %v1728
  %1747 = vst [vmem:[%s1737 + $0x48] sm:$0xff] %v1730
  %1748 = vst [vmem:[%s1737 + $0x50] sm:$0xff] %v1732
  %1749 = vst [vmem:[%s1737 + $0x58] sm:$0xff] %v1734
  %1750 = vst [vmem:[%s1737 + $0x60] sm:$0xff] %v1736
  // Predicated region
  $region10: #{spectrogram_feature_binary2.1} parent=0 // pred_check
    _
  $region11: #{spectrogram_feature_binary2.1} parent=0 // pred_check_branch
    %1752 = sbr.rel (0) target = $region13
  $region12: #{spectrogram_feature_binary2.1} parent=0 // pred_region
    _
  $region13: #{spectrogram_feature_binary2.1} parent=0 // pred_fallthru
    _
  // Predicated region
  $region14: #{spectrogram_feature_binary2.1} parent=0 // pred_check
    _
  $region15: #{spectrogram_feature_binary2.1} parent=0 // pred_check_branch
    %1754 = sbr.rel (0) target = $region17
  $region16: #{spectrogram_feature_binary2.1} parent=0 // pred_region
    _
  $region17: #{spectrogram_feature_binary2.1} parent=0 // pred_fallthru
    _

</llo_original>
